<compile_context>
chip_gen: v7x
topology: tpu7x:2x2x1
jax: 0.10.0
libtpu: 0.0.40
codegen_flags: <defaults>
</compile_context>

<pallas_src>
import math

import jax
import jax.numpy as jnp
from jax import lax
from jax.experimental import pallas as pl
from jax.experimental.pallas import tpu as pltpu


def _round_up(x: int, m: int) -> int:
    return ((x + m - 1) // m) * m


def _pick_tile(n_rows: int, block_rows: int, min_steps: int = 4, align: int = 128) -> int:
    """Row tile: as large as possible (per-step pipeline overhead ~0.35us makes
    small tiles overhead-bound) but capped so the grid keeps >= min_steps steps
    (so v7x's 2 TensorCores get sharded work and the DMA pipeline overlaps).
    128-row alignment keeps blocks (8,128)/bf16-sublane friendly and the
    lane-dense log_prob output rows a multiple of 128."""
    target = -(-n_rows // min_steps)                      # cdiv(n_rows, min_steps)
    t = _round_up(max(target, align), align)
    return max(align, min(_round_up(block_rows, align), t))


# ---------------------------------------------------------------------------
# log_prob kernel (transposed / lane-dense formulation)
# ---------------------------------------------------------------------------
def _mog_logprob_kernel(z_ref, lin_w_ref, quad_w_ref, const_ref, out_ref):
    # z_ref:      (TB, M)  latents (f32 or bf16; upcast in-register)
    # lin_w_ref:  (Kp, M)  = means / std^2            (padded rows are 0)
    # quad_w_ref: (Kp, M)  = -0.5 / std^2             (padded rows are 0)
    # const_ref:  (Kp, 1)  log w_k - sum log std - M/2 log 2pi - 0.5 sum mu^2/std^2
    #                      (padded rows are -1e30 -> exp underflows to 0)
    # out_ref:    (1, TB)  mixture log-density, lane-dense row
    z_t = jnp.transpose(z_ref[...].astype(jnp.float32))                      # (M, TB)
    lp = jnp.dot(lin_w_ref[...], z_t,
                 preferred_element_type=jnp.float32,
                 precision=lax.Precision.HIGHEST)                            # (Kp, TB)
    lp = lp + jnp.dot(quad_w_ref[...], z_t * z_t,
                      preferred_element_type=jnp.float32,
                      precision=lax.Precision.HIGHEST)
    lp = lp + const_ref[...]                                                 # (Kp, TB)
    m = jnp.max(lp, axis=0, keepdims=True)                                   # (1, TB)
    s = jnp.sum(jnp.exp(lp - m), axis=0, keepdims=True)                      # (1, TB)
    out_ref[...] = m + jnp.log(s)


# ---------------------------------------------------------------------------
# sample kernel: categorical selection + fused parameter gather + affine
# ---------------------------------------------------------------------------
def _mog_sample_kernel(u_ref, eps_ref, cum_lo_ref, cum_hi_ref, table_ref, out_ref):
    # u_ref:       (TN, 1)   selection uniforms in [0, 1)
    # eps_ref:     (TN, M)   standard-normal noise
    # cum_lo/hi:   (1, Kp)   CDF bin edges (padded bins never match: lo=hi=3.0)
    # table_ref:   (Kp, 2M)  [means | stds] fused gather table (padded rows 0)
    # out_ref:     (TN, M)   samples
    m = out_ref.shape[-1]
    u = u_ref[...]                                                           # (TN, 1)
    onehot = ((u >= cum_lo_ref[...]) & (u < cum_hi_ref[...])).astype(jnp.float32)
    params = jnp.dot(onehot, table_ref[...],
                     preferred_element_type=jnp.float32)                     # (TN, 2M)
    mu = params[:, :m]
    sd = params[:, m:]
    out_ref[...] = mu + sd * eps_ref[...].astype(jnp.float32)


# ---------------------------------------------------------------------------
# MoGPrior "module"
# ---------------------------------------------------------------------------
class MoGPrior:
    """JAX/Pallas port of the PyTorch MoGPrior.

    forward()/__call__() mirrors the torch module by returning the mixture
    "distribution" (self), which exposes log_prob() and sample() backed by
    Pallas TPU kernels.
    """

    def __init__(self, M, num_components=10, *, key=None, block_rows=8192):
        self.M = int(M)
        self.num_components = int(num_components)
        self.block_rows = int(block_rows)
        if key is None:
            key = jax.random.PRNGKey(0)
        # Parameters, initialized exactly as in the torch module.
        self.means = 2.0 * jax.random.normal(key, (num_components, M), dtype=jnp.float32)
        self.stds = jnp.ones((num_components, M), dtype=jnp.float32)
        self.mixing_logits = jnp.ones((num_components,), dtype=jnp.float32)
        self._refresh_derived()

    def _refresh_derived(self):
        """Fold everything that depends only on the parameters into small
        padded tables so the kernels never recompute log/reciprocal of std."""
        K, M = self.num_components, self.M
        Kp = _round_up(K, 8)
        self._Kp = Kp
        pad = Kp - K

        inv_var = 1.0 / (self.stds * self.stds)                          # (K, M)
        lin = self.means * inv_var                                        # (K, M)
        quad = -0.5 * inv_var                                             # (K, M)
        log_w = jax.nn.log_softmax(self.mixing_logits)                    # (K,)
        const = (log_w
                 - jnp.sum(jnp.log(self.stds), axis=-1)
                 - 0.5 * M * math.log(2.0 * math.pi)
                 - 0.5 * jnp.sum(self.means * self.means * inv_var, axis=-1))  # (K,)

        self._lin_w = jnp.pad(lin, ((0, pad), (0, 0))).astype(jnp.float32)        # (Kp, M)
        self._quad_w = jnp.pad(quad, ((0, pad), (0, 0))).astype(jnp.float32)      # (Kp, M)
        self._comp_const = jnp.pad(const, (0, pad), constant_values=-1e30
                                   ).reshape(Kp, 1).astype(jnp.float32)           # (Kp, 1)

        # CDF bins for categorical sampling; padded bins can never be selected.
        probs = jax.nn.softmax(self.mixing_logits)
        cdf = jnp.cumsum(probs)
        lo = jnp.concatenate([jnp.zeros((1,), jnp.float32), cdf[:-1]])
        hi = cdf.at[-1].set(1.5)                                           # top edge > 1
        self._cum_lo = jnp.pad(lo, (0, pad), constant_values=3.0).reshape(1, Kp)
        self._cum_hi = jnp.pad(hi, (0, pad), constant_values=3.0).reshape(1, Kp)

        # Fused [means | stds] gather table for the sampler.
        self._mu_sd_table = jnp.pad(
            jnp.concatenate([self.means, self.stds], axis=1),
            ((0, pad), (0, 0))).astype(jnp.float32)                        # (Kp, 2M)

    def forward(self):
        """Mirrors the torch module: returns the mixture 'distribution'."""
        return self

    __call__ = forward

    # ---- log p(z) under the MoG prior ------------------------------------
    def log_prob(self, z):
        """z: (B, M) float (f32 or bf16). Returns (B,) f32 log-densities."""
        B, M = z.shape
        assert M == self.M
        Kp = self._Kp
        tb = _pick_tile(B, self.block_rows)
        bp = _round_up(B, tb)
        if bp != B:
            z = jnp.pad(z, ((0, bp - B), (0, 0)))
        out = pl.pallas_call(
            _mog_logprob_kernel,
            out_shape=jax.ShapeDtypeStruct((1, bp), jnp.float32),
            grid=(bp // tb,),
            in_specs=[
                pl.BlockSpec((tb, M), lambda i: (i, 0)),
                pl.BlockSpec((Kp, M), lambda i: (0, 0)),
                pl.BlockSpec((Kp, M), lambda i: (0, 0)),
                pl.BlockSpec((Kp, 1), lambda i: (0, 0)),
            ],
            out_specs=pl.BlockSpec((1, tb), lambda i: (0, i)),
            compiler_params=pltpu.CompilerParams(
                dimension_semantics=("parallel",),
                vmem_limit_bytes=32 * 1024 * 1024,
            ),
        )(z, self._lin_w, self._quad_w, self._comp_const)
        return out[0, :B]

    # ---- draw n samples ----------------------------------------------------
    def sample(self, seed, n):
        """Returns (n, M) f32 samples from the MoG prior."""
        M, Kp = self.M, self._Kp
        tn = _pick_tile(n, self.block_rows)
        np_ = _round_up(n, tn)
        key = seed if hasattr(seed, "dtype") else jax.random.PRNGKey(int(seed))
        k_u, k_eps = jax.random.split(key)
        u = jax.random.uniform(k_u, (np_, 1), dtype=jnp.float32)
        eps = jax.random.normal(k_eps, (np_, M), dtype=jnp.float32)
        z = pl.pallas_call(
            _mog_sample_kernel,
            out_shape=jax.ShapeDtypeStruct((np_, M), jnp.float32),
            grid=(np_ // tn,),
            in_specs=[
                pl.BlockSpec((tn, 1), lambda i: (i, 0)),
                pl.BlockSpec((tn, M), lambda i: (i, 0)),
                pl.BlockSpec((1, Kp), lambda i: (0, 0)),
                pl.BlockSpec((1, Kp), lambda i: (0, 0)),
                pl.BlockSpec((Kp, 2 * M), lambda i: (0, 0)),
            ],
            out_specs=pl.BlockSpec((tn, M), lambda i: (i, 0)),
            compiler_params=pltpu.CompilerParams(
                dimension_semantics=("parallel",),
                vmem_limit_bytes=32 * 1024 * 1024,
            ),
        )(u, eps, self._cum_lo, self._cum_hi, self._mu_sd_table)
        return z[:n]


# ---------------------------------------------------------------------------
# Pure-JAX reference (mirrors td.MixtureSameFamily(...).log_prob)
# ---------------------------------------------------------------------------
def _ref_log_prob(z, means, stds, logits):
    z = z.astype(jnp.float32)
    log_w = jax.nn.log_softmax(logits)                                    # (K,)
    diff = (z[:, None, :] - means[None, :, :]) / stds[None, :, :]         # (B, K, M)
    comp = (-0.5 * jnp.sum(diff * diff, axis=-1)
            - jnp.sum(jnp.log(stds), axis=-1)[None, :]
            - 0.5 * means.shape[1] * math.log(2.0 * math.pi))             # (B, K)
    return jax.scipy.special.logsumexp(comp + log_w[None, :], axis=-1)    # (B,)


if __name__ == "__main__":
    key = jax.random.PRNGKey(0)
    k_init, k_z = jax.random.split(key)

    M, K = 32, 10
    B = 1000                     # NOT a multiple of the tile size -> exercises padding
    prior = MoGPrior(M, num_components=K, key=k_init)
    dist = prior()               # mirrors forward() returning the distribution

    # ---- log_prob -----------------------------------------------------------
    z = jax.random.normal(k_z, (B, M), dtype=jnp.float32)
    lp = jax.block_until_ready(dist.log_prob(z))
    lp_ref = _ref_log_prob(z, prior.means, prior.stds, prior.mixing_logits)
    assert lp.shape == (B,)
    err = float(jnp.max(jnp.abs(lp - lp_ref)))
    assert err < 1e-2, f"log_prob mismatch, max abs err {err}"

    # bf16 latents: the kernel upcasts in-register (no wrapper-side f32 copy).
    z_bf16 = z.astype(jnp.bfloat16)
    lp_bf16 = jax.block_until_ready(dist.log_prob(z_bf16))
    lp_bf16_ref = _ref_log_prob(z_bf16, prior.means, prior.stds, prior.mixing_logits)
    err_bf16 = float(jnp.max(jnp.abs(lp_bf16 - lp_bf16_ref)))
    assert err_bf16 < 3e-2, f"bf16 log_prob mismatch, max abs err {err_bf16}"

    # ---- sample -------------------------------------------------------------
    n = 2048
    s = jax.block_until_ready(dist.sample(seed=0, n=n))
    assert s.shape == (n, M)
    assert bool(jnp.all(jnp.isfinite(s)))
    w = jax.nn.softmax(prior.mixing_logits)
    mix_mean = w @ prior.means                                            # (M,)
    mix_var = w @ (prior.stds ** 2 + prior.means ** 2) - mix_mean ** 2    # (M,)
    mean_err = float(jnp.max(jnp.abs(jnp.mean(s, axis=0) - mix_mean)))
    std_err = float(jnp.max(jnp.abs(jnp.std(s, axis=0) - jnp.sqrt(mix_var))))
    assert mean_err < 0.5, f"sample mean off by {mean_err}"
    assert std_err < 0.5, f"sample std off by {std_err}"

    print("KERNEL_OK")
</pallas_src>

<mosaic_0001>
module attributes {stable_mosaic.version = 11 : i64} {
  func.func @_mog_logprob_kernel(%arg0: i32, %arg1: memref<256x32xf32, #tpu.memory_space<vmem>>, %arg2: memref<16x32xf32, #tpu.memory_space<vmem>>, %arg3: memref<16x32xf32, #tpu.memory_space<vmem>>, %arg4: memref<16x1xf32, #tpu.memory_space<vmem>>, %arg5: memref<1x256xf32, #tpu.memory_space<vmem>>) attributes {dimension_semantics = [#tpu.dimension_semantics<parallel>], iteration_bounds = array<i64: 4>, scalar_prefetch = 0 : i64, scratch_operands = 0 : i64, tpu.core_type = #tpu.core_type<tc>, window_params = [{transform_indices = @transform_0, window_bounds = array<i64: 256, 32>}, {pipeline_mode = #tpu.pipeline_mode<synchronous>, transform_indices = @transform_1, window_bounds = array<i64: 16, 32>}, {pipeline_mode = #tpu.pipeline_mode<synchronous>, transform_indices = @transform_2, window_bounds = array<i64: 16, 32>}, {pipeline_mode = #tpu.pipeline_mode<synchronous>, transform_indices = @transform_3, window_bounds = array<i64: 16, 1>}, {transform_indices = @transform_4, window_bounds = array<i64: 1, 256>}]} {
    %c0 = arith.constant 0 : index
    %c0_0 = arith.constant 0 : index
    %0 = vector.load %arg1[%c0, %c0_0] : memref<256x32xf32, #tpu.memory_space<vmem>>, vector<256x32xf32>
    %1 = tpu.transpose %0, [1, 0] : vector<256x32xf32> -> vector<32x256xf32>
    %c0_1 = arith.constant 0 : index
    %c0_2 = arith.constant 0 : index
    %2 = vector.load %arg2[%c0_1, %c0_2] : memref<16x32xf32, #tpu.memory_space<vmem>>, vector<16x32xf32>
    %cst = arith.constant dense<0.000000e+00> : vector<16x256xf32>
    %3 = tpu.matmul %2, %1, %cst {dimension_numbers = #tpu.dot_dimension_numbers<[1], [0], [0], [1], [0, 0, 1, 1], [], []>, precision = #tpu.contract_precision<fp32>} : vector<16x32xf32>, vector<32x256xf32>, vector<16x256xf32> -> vector<16x256xf32>
    %c0_3 = arith.constant 0 : index
    %c0_4 = arith.constant 0 : index
    %4 = vector.load %arg3[%c0_3, %c0_4] : memref<16x32xf32, #tpu.memory_space<vmem>>, vector<16x32xf32>
    %5 = arith.mulf %1, %1 : vector<32x256xf32>
    %cst_5 = arith.constant dense<0.000000e+00> : vector<16x256xf32>
    %6 = tpu.matmul %4, %5, %cst_5 {dimension_numbers = #tpu.dot_dimension_numbers<[1], [0], [0], [1], [0, 0, 1, 1], [], []>, precision = #tpu.contract_precision<fp32>} : vector<16x32xf32>, vector<32x256xf32>, vector<16x256xf32> -> vector<16x256xf32>
    %7 = arith.addf %3, %6 : vector<16x256xf32>
    %c0_6 = arith.constant 0 : index
    %c0_7 = arith.constant 0 : index
    %8 = vector.load %arg4[%c0_6, %c0_7] : memref<16x1xf32, #tpu.memory_space<vmem>>, vector<16x1xf32>
    %9 = vector.broadcast %8 : vector<16x1xf32> to vector<16x256xf32>
    %10 = arith.addf %7, %9 : vector<16x256xf32>
    %cst_8 = arith.constant dense<0xFF800000> : vector<256xf32>
    %11 = vector.multi_reduction <maximumf>, %10, %cst_8 [0] : vector<16x256xf32> to vector<256xf32>
    %12 = vector.shape_cast %11 : vector<256xf32> to vector<1x256xf32>
    %13 = vector.broadcast %12 : vector<1x256xf32> to vector<16x256xf32>
    %14 = arith.subf %10, %13 : vector<16x256xf32>
    %15 = math.exp %14 : vector<16x256xf32>
    %cst_9 = arith.constant dense<0.000000e+00> : vector<256xf32>
    %16 = vector.multi_reduction <add>, %15, %cst_9 [0] : vector<16x256xf32> to vector<256xf32>
    %17 = vector.shape_cast %16 : vector<256xf32> to vector<1x256xf32>
    %18 = math.log %17 : vector<1x256xf32>
    %19 = arith.addf %12, %18 : vector<1x256xf32>
    %c0_10 = arith.constant 0 : index
    %c0_11 = arith.constant 0 : index
    %20 = vector.load %arg5[%c0_10, %c0_11] : memref<1x256xf32, #tpu.memory_space<vmem>>, vector<1x256xf32>
    tpu.vector_store %arg5[%c0_10, %c0_11], %19 {strides = array<i32>} : memref<1x256xf32, #tpu.memory_space<vmem>>, vector<1x256xf32>,
    return
  }
  func.func @transform_0(%arg0: i32) -> (i32, i32) {
    %c0_i32 = arith.constant 0 : i32
    %c0_i32_0 = arith.constant 0 : i32
    return %arg0, %c0_i32 : i32, i32
  }
  func.func @transform_1(%arg0: i32) -> (i32, i32) {
    %c0_i32 = arith.constant 0 : i32
    %c0_i32_0 = arith.constant 0 : i32
    %c0_i32_1 = arith.constant 0 : i32
    return %c0_i32, %c0_i32_0 : i32, i32
  }
  func.func @transform_2(%arg0: i32) -> (i32, i32) {
    %c0_i32 = arith.constant 0 : i32
    %c0_i32_0 = arith.constant 0 : i32
    %c0_i32_1 = arith.constant 0 : i32
    return %c0_i32, %c0_i32_0 : i32, i32
  }
  func.func @transform_3(%arg0: i32) -> (i32, i32) {
    %c0_i32 = arith.constant 0 : i32
    %c0_i32_0 = arith.constant 0 : i32
    %c0_i32_1 = arith.constant 0 : i32
    return %c0_i32, %c0_i32_0 : i32, i32
  }
  func.func @transform_4(%arg0: i32) -> (i32, i32) {
    %c0_i32 = arith.constant 0 : i32
    %c0_i32_0 = arith.constant 0 : i32
    return %c0_i32, %arg0 : i32, i32
  }
}

</mosaic_0001>

<llo_original>
// kernel: tpu_custom_call.1
$region0: #{tpu_custom_call.1}
  #allocation0 [shape = 'u32[]', space=smem, size = 0x4, offset = 0x4, fixed_abs, tag = 'smem constant byte address 0x4 - core index']
  #allocation1 [shape = 'u32[144,128]{1,0:T(1,128)}', space=vmem, size = 0x12000, scoped, tag = 'internal scratch']
  %s0 = inlined_call_operand.vmem [shape: f32[1024,32], index: 0, kind: input, shape index: {}]
  %s1 = inlined_call_operand.vmem [shape: f32[16,32], index: 1, kind: input, shape index: {}]
  %s2 = inlined_call_operand.vmem [shape: f32[16,32], index: 2, kind: input, shape index: {}]
  %s3 = inlined_call_operand.vmem [shape: f32[16,1], index: 3, kind: input, shape index: {}]
  %s4 = inlined_call_operand.hbm [shape: f32[1,1024], index: 4, kind: output, shape index: {}]
  %s5 = sld [smem:[#allocation0]]
  $region49: #{tpu_custom_call.1} parent=0
    _
  %s7 = ssub.s32 1, %s5
  %s8 = scalar_select 0, %s7, %s5
  $region1: #{tpu_custom_call.1} parent=0
    #allocation2 [shape = 'u8[2048]{0}', space=vmem, size = 0x800, scoped, tag = 'output window, operand 0']
    #allocation3 [shape = 's32[2]{0}', space=sflag, size = 0x8, scoped, tag = 'scoped memory for tpu_custom_call.1']
    %9 = vsyncpa [#allocation3], 0
    %s10 = scalar_lea.sflag [#allocation3], 1
    %11 = vsyncpa %s10, 0
    loop: start=0, step=1, limit=6
    $region2: #{tpu_custom_call.1} parent=1 // loop_pre_header
      _
    $region3: #{tpu_custom_call.1} parent=1 // loop_header
      %s13 = sphi 0, %s17
      %p14 = scmp.ge.s32.totalorder %s13, 6
      %s23 = sphi 0, %s25
      %s26 = sphi 0, %s23
      %s27 = sphi 0, %s26
      %s43 = sphi 0, %s27
      %s47 = sphi 0, %s47
      %s49 = sphi 0, %s47
      %s50 = sphi 0, %s49
      %s64 = sphi 0, %s50
      %s68 = sphi 0, %s68
      %s70 = sphi 0, %s68
      %s71 = sphi 0, %s70
      %s85 = sphi 0, %s71
      %s89 = sphi 0, %s89
      %s91 = sphi 0, %s89
      %s92 = sphi 0, %s91
      %s106 = sphi 0, %s92
      %s112 = sphi 0, %s114
      %s115 = sphi 0, %s112
      %s116 = sphi 0, %s115
      %s132 = sphi 0, %s116
    $region4: #{tpu_custom_call.1} parent=1 // loop_header_branch
      %16 = sbr.rel (%p14) target = $region8
    $region5: #{tpu_custom_call.1} parent=1 // loop_body
      %s18 = ssub.s32 %s13, 1
      %s19 = ssub.s32 %s13, 2
      %s20 = sadd.s32 %s13, 1
      %s21 = ssub.s32 %s13, %s20
      %p22 = scmp.eq.s32.totalorder %s21, 0
      %s24 = sadd.s32 %s23, 1
      %s25 = scalar_select %p22, %s23, %s24
      %p28 = pneg %p22
      %p29 = scmp.eq.s32.totalorder %s13, 3
      %p30 = por %p28, %p29
      %p31 = scmp.ne.s32.totalorder %s23, %s26
      %p32 = scmp.eq.s32.totalorder %s13, 0
      %p33 = por %p31, %p32
      %p34 = scmp.ne.s32.totalorder %s23, %s26
      %p35 = scmp.eq.s32.totalorder %s18, 3
      %p36 = por %p34, %p35
      %p37 = scmp.ne.s32.totalorder %s26, %s27
      %p38 = scmp.eq.s32.totalorder %s18, 0
      %p39 = por %p37, %p38
      %p40 = scmp.ne.s32.totalorder %s26, %s27
      %p41 = scmp.eq.s32.totalorder %s19, 3
      %p42 = por %p40, %p41
      %p44 = scmp.ne.s32.totalorder %s27, %s43
      %p45 = scmp.eq.s32.totalorder %s19, 0
      %p46 = por %p44, %p45
      %s48 = sadd.s32 %s47, 1
      %p51 = scmp.eq.s32.totalorder %s13, 3
      %p52 = scmp.ne.s32.totalorder %s47, %s49
      %p53 = scmp.eq.s32.totalorder %s13, 0
      %p54 = por %p52, %p53
      %p55 = scmp.ne.s32.totalorder %s47, %s49
      %p56 = scmp.eq.s32.totalorder %s18, 3
      %p57 = por %p55, %p56
      %p58 = scmp.ne.s32.totalorder %s49, %s50
      %p59 = scmp.eq.s32.totalorder %s18, 0
      %p60 = por %p58, %p59
      %p61 = scmp.ne.s32.totalorder %s49, %s50
      %p62 = scmp.eq.s32.totalorder %s19, 3
      %p63 = por %p61, %p62
      %p65 = scmp.ne.s32.totalorder %s50, %s64
      %p66 = scmp.eq.s32.totalorder %s19, 0
      %p67 = por %p65, %p66
      %s69 = sadd.s32 %s68, 1
      %p72 = scmp.eq.s32.totalorder %s13, 3
      %p73 = scmp.ne.s32.totalorder %s68, %s70
      %p74 = scmp.eq.s32.totalorder %s13, 0
      %p75 = por %p73, %p74
      %p76 = scmp.ne.s32.totalorder %s68, %s70
      %p77 = scmp.eq.s32.totalorder %s18, 3
      %p78 = por %p76, %p77
      %p79 = scmp.ne.s32.totalorder %s70, %s71
      %p80 = scmp.eq.s32.totalorder %s18, 0
      %p81 = por %p79, %p80
      %p82 = scmp.ne.s32.totalorder %s70, %s71
      %p83 = scmp.eq.s32.totalorder %s19, 3
      %p84 = por %p82, %p83
      %p86 = scmp.ne.s32.totalorder %s71, %s85
      %p87 = scmp.eq.s32.totalorder %s19, 0
      %p88 = por %p86, %p87
      %s90 = sadd.s32 %s89, 1
      %p93 = scmp.eq.s32.totalorder %s13, 3
      %p94 = scmp.ne.s32.totalorder %s89, %s91
      %p95 = scmp.eq.s32.totalorder %s13, 0
      %p96 = por %p94, %p95
      %p97 = scmp.ne.s32.totalorder %s89, %s91
      %p98 = scmp.eq.s32.totalorder %s18, 3
      %p99 = por %p97, %p98
      %p100 = scmp.ne.s32.totalorder %s91, %s92
      %p101 = scmp.eq.s32.totalorder %s18, 0
      %p102 = por %p100, %p101
      %p103 = scmp.ne.s32.totalorder %s91, %s92
      %p104 = scmp.eq.s32.totalorder %s19, 3
      %p105 = por %p103, %p104
      %p107 = scmp.ne.s32.totalorder %s92, %s106
      %p108 = scmp.eq.s32.totalorder %s19, 0
      %p109 = por %p107, %p108
      %s110 = ssub.s32 %s13, %s20
      %p111 = scmp.eq.s32.totalorder %s110, 0
      %s113 = sadd.s32 %s112, 1
      %s114 = scalar_select %p111, %s112, %s113
      %p117 = pneg %p111
      %p118 = scmp.eq.s32.totalorder %s13, 3
      %p119 = por %p117, %p118
      %p120 = scmp.ne.s32.totalorder %s112, %s115
      %p121 = scmp.eq.s32.totalorder %s13, 0
      %p122 = por %p120, %p121
      %p123 = scmp.ne.s32.totalorder %s112, %s115
      %p124 = scmp.eq.s32.totalorder %s18, 3
      %p125 = por %p123, %p124
      %p126 = scmp.ne.s32.totalorder %s115, %s116
      %p127 = scmp.eq.s32.totalorder %s18, 0
      %p128 = por %p126, %p127
      %p129 = scmp.ne.s32.totalorder %s115, %s116
      %p130 = scmp.eq.s32.totalorder %s19, 3
      %p131 = por %p129, %p130
      %p133 = scmp.ne.s32.totalorder %s116, %s132
      %p134 = scmp.eq.s32.totalorder %s19, 0
      %p135 = por %p133, %p134
      %p136 = scmp.le.s32.totalorder 1, %s13
      %p137 = scmp.lt.s32.totalorder %s13, 5
      %p138 = pnand %p136, %p137
      %p139 = pneg %p138
      // Predicated region
      $region9: #{tpu_custom_call.1} parent=5 // pred_check
        _
      $region10: #{tpu_custom_call.1} parent=5 // pred_check_branch
        %141 = sbr.rel (%p138) target = $region12
      $region11: #{tpu_custom_call.1} parent=5 // pred_region
        %s142 = ssub.s32 %s13, 1
        // Predicated region
        $region13: #{tpu_custom_call.1} parent=11 // pred_check
          %p143 = pneg %p60
        $region14: #{tpu_custom_call.1} parent=11 // pred_check_branch
          %145 = sbr.rel (%p143) target = $region16
        $region15: #{tpu_custom_call.1} parent=11 // pred_region
          _
        $region16: #{tpu_custom_call.1} parent=11 // pred_fallthru
          _
        // Predicated region
        $region17: #{tpu_custom_call.1} parent=11 // pred_check
          %p146 = pneg %p81
        $region18: #{tpu_custom_call.1} parent=11 // pred_check_branch
          %148 = sbr.rel (%p146) target = $region20
        $region19: #{tpu_custom_call.1} parent=11 // pred_region
          _
        $region20: #{tpu_custom_call.1} parent=11 // pred_fallthru
          _
        // Predicated region
        $region21: #{tpu_custom_call.1} parent=11 // pred_check
          %p149 = pneg %p102
        $region22: #{tpu_custom_call.1} parent=11 // pred_check_branch
          %151 = sbr.rel (%p149) target = $region24
        $region23: #{tpu_custom_call.1} parent=11 // pred_region
          _
        $region24: #{tpu_custom_call.1} parent=11 // pred_fallthru
          _
      $region12: #{tpu_custom_call.1} parent=5 // pred_fallthru
        _
      %p152 = scmp.lt.s32.totalorder %s13, 4
      // Predicated region
      $region25: #{tpu_custom_call.1} parent=5 // pred_check
        %p153 = pneg %p152
      $region26: #{tpu_custom_call.1} parent=5 // pred_check_branch
        %155 = sbr.rel (%p153) target = $region28
      $region27: #{tpu_custom_call.1} parent=5 // pred_region
        // Predicated region
        $region29: #{tpu_custom_call.1} parent=27 // pred_check
          %p156 = pneg %p33
        $region30: #{tpu_custom_call.1} parent=27 // pred_check_branch
          %158 = sbr.rel (%p156) target = $region32
        $region31: #{tpu_custom_call.1} parent=27 // pred_region
          %s159 = smul.u32 32, %s13
          %p160 = scmp.lt.s32.totalorder %s159, 127
          %s161 = scalar_select %p160, %s159, 127
          %s162 = smul.addr %s161, 8
          %s163 = scalar_lea.vmem %s0, %s162
          %s164 = smul.u32 32, %s13
        $region32: #{tpu_custom_call.1} parent=27 // pred_fallthru
          _
      $region28: #{tpu_custom_call.1} parent=5 // pred_fallthru
        _
      %p165 = scmp.le.s32.totalorder 1, %s13
      %p166 = scmp.lt.s32.totalorder %s13, 5
      %p167 = pnand %p165, %p166
      %p168 = pneg %p167
      // Predicated region
      $region33: #{tpu_custom_call.1} parent=5 // pred_check
        _
      $region34: #{tpu_custom_call.1} parent=5 // pred_check_branch
        %170 = sbr.rel (%p167) target = $region36
      $region35: #{tpu_custom_call.1} parent=5 // pred_region
        %s171 = ssub.s32 %s13, 1
        %s172 = smul.u32 32, %s18
        %p173 = scmp.lt.s32.totalorder %s172, 127
        %s174 = scalar_select %p173, %s172, 127
        %s175 = smul.addr %s174, 8
        %s176 = scalar_lea.vmem %s0, %s175
        %p177 = pneg %p39
        %p178 = pneg %p36
        %p179 = pneg %p60
        %p180 = pneg %p57
        %p181 = pneg %p81
        %p182 = pneg %p78
        %p183 = pneg %p102
        %p184 = pneg %p99
        %p185 = pneg %p128
        %p186 = pneg %p125
        %s187 = sand.u32 %s115, 1
        %s188 = scalar_lea.sflag [#allocation3], %s187
        %s189 = sand.u32 %s115, 1
        %s190 = smul.addr %s189, 2
        %s191 = scalar_lea.vmem [#allocation2], %s190
        %s192 = smul.u32 32, %s18
        %p193 = scmp.lt.s32.totalorder %s192, 127
        %s194 = scalar_select %p193, %s192, 127
        %s195 = smul.addr %s194, 8
        %s196 = scalar_lea.vmem %s0, %s195
        %s197 = smul.u32 32, %s18
        %s198 = smul.u32 2, %s18
        %v199 = vld [vmem:[%s196] sm:$0xff]
        %v200 = vld [vmem:[%s196 + $0x8] sm:$0xff]
        %v201 = vld [vmem:[%s196 + $0x10] sm:$0xff]
        %v202 = vld [vmem:[%s196 + $0x18] sm:$0xff]
        %v203 = vld [vmem:[%s196 + $0x20] sm:$0xff]
        %v204 = vld [vmem:[%s196 + $0x28] sm:$0xff]
        %v205 = vld [vmem:[%s196 + $0x30] sm:$0xff]
        %v206 = vld [vmem:[%s196 + $0x38] sm:$0xff]
        %v207 = vld [vmem:[%s196 + $0x40] sm:$0xff]
        %v208 = vld [vmem:[%s196 + $0x48] sm:$0xff]
        %v209 = vld [vmem:[%s196 + $0x50] sm:$0xff]
        %v210 = vld [vmem:[%s196 + $0x58] sm:$0xff]
        %v211 = vld [vmem:[%s196 + $0x60] sm:$0xff]
        %v212 = vld [vmem:[%s196 + $0x68] sm:$0xff]
        %v213 = vld [vmem:[%s196 + $0x70] sm:$0xff]
        %v214 = vld [vmem:[%s196 + $0x78] sm:$0xff]
        %v215 = vld [vmem:[%s196 + $0x80] sm:$0xff]
        %v216 = vld [vmem:[%s196 + $0x88] sm:$0xff]
        %v217 = vld [vmem:[%s196 + $0x90] sm:$0xff]
        %v218 = vld [vmem:[%s196 + $0x98] sm:$0xff]
        %v219 = vld [vmem:[%s196 + $0xa0] sm:$0xff]
        %v220 = vld [vmem:[%s196 + $0xa8] sm:$0xff]
        %v221 = vld [vmem:[%s196 + $0xb0] sm:$0xff]
        %v222 = vld [vmem:[%s196 + $0xb8] sm:$0xff]
        %v223 = vld [vmem:[%s196 + $0xc0] sm:$0xff]
        %v224 = vld [vmem:[%s196 + $0xc8] sm:$0xff]
        %v225 = vld [vmem:[%s196 + $0xd0] sm:$0xff]
        %v226 = vld [vmem:[%s196 + $0xd8] sm:$0xff]
        %v227 = vld [vmem:[%s196 + $0xe0] sm:$0xff]
        %v228 = vld [vmem:[%s196 + $0xe8] sm:$0xff]
        %v229 = vld [vmem:[%s196 + $0xf0] sm:$0xff]
        %v230 = vld [vmem:[%s196 + $0xf8] sm:$0xff]
        %231 = vxpose.xlu0.b32.start [1/16] %v199, 128
        %232 = vxpose.xlu0.b32.cont [2/16] %v200, 128
        %233 = vxpose.xlu0.b32.cont [3/16] %v201, 128
        %234 = vxpose.xlu0.b32.cont [4/16] %v202, 128
        %235 = vxpose.xlu0.b32.cont [5/16] %v203, 128
        %236 = vxpose.xlu0.b32.cont [6/16] %v204, 128
        %237 = vxpose.xlu0.b32.cont [7/16] %v205, 128
        %238 = vxpose.xlu0.b32.cont [8/16] %v206, 128
        %239 = vxpose.xlu0.b32.cont [9/16] %v207, 128
        %240 = vxpose.xlu0.b32.cont [10/16] %v208, 128
        %241 = vxpose.xlu0.b32.cont [11/16] %v209, 128
        %242 = vxpose.xlu0.b32.cont [12/16] %v210, 128
        %243 = vxpose.xlu0.b32.cont [13/16] %v211, 128
        %244 = vxpose.xlu0.b32.cont [14/16] %v212, 128
        %245 = vxpose.xlu0.b32.cont [15/16] %v213, 128
        %246 = vxpose.xlu0.b32.end [16/16] %v214, 128
        %v247 = vpop.trf.xlu0
        %v248 = vpop.trf.xlu0
        %v249 = vpop.trf.xlu0
        %v250 = vpop.trf.xlu0
        %v251 = vpop.trf.xlu0
        %v252 = vpop.trf.xlu0
        %v253 = vpop.trf.xlu0
        %v254 = vpop.trf.xlu0
        %v255 = vpop.trf.xlu0
        %v256 = vpop.trf.xlu0
        %v257 = vpop.trf.xlu0
        %v258 = vpop.trf.xlu0
        %v259 = vpop.trf.xlu0
        %v260 = vpop.trf.xlu0
        %v261 = vpop.trf.xlu0
        %v262 = vpop.trf.xlu0
        %263 = vxpose.xlu0.b32.start [1/16] %v215, 128
        %264 = vxpose.xlu0.b32.cont [2/16] %v216, 128
        %265 = vxpose.xlu0.b32.cont [3/16] %v217, 128
        %266 = vxpose.xlu0.b32.cont [4/16] %v218, 128
        %267 = vxpose.xlu0.b32.cont [5/16] %v219, 128
        %268 = vxpose.xlu0.b32.cont [6/16] %v220, 128
        %269 = vxpose.xlu0.b32.cont [7/16] %v221, 128
        %270 = vxpose.xlu0.b32.cont [8/16] %v222, 128
        %271 = vxpose.xlu0.b32.cont [9/16] %v223, 128
        %272 = vxpose.xlu0.b32.cont [10/16] %v224, 128
        %273 = vxpose.xlu0.b32.cont [11/16] %v225, 128
        %274 = vxpose.xlu0.b32.cont [12/16] %v226, 128
        %275 = vxpose.xlu0.b32.cont [13/16] %v227, 128
        %276 = vxpose.xlu0.b32.cont [14/16] %v228, 128
        %277 = vxpose.xlu0.b32.cont [15/16] %v229, 128
        %278 = vxpose.xlu0.b32.end [16/16] %v230, 128
        %v279 = vpop.trf.xlu0
        %v280 = vpop.trf.xlu0
        %v281 = vpop.trf.xlu0
        %v282 = vpop.trf.xlu0
        %v283 = vpop.trf.xlu0
        %v284 = vpop.trf.xlu0
        %v285 = vpop.trf.xlu0
        %v286 = vpop.trf.xlu0
        %v287 = vpop.trf.xlu0
        %v288 = vpop.trf.xlu0
        %v289 = vpop.trf.xlu0
        %v290 = vpop.trf.xlu0
        %v291 = vpop.trf.xlu0
        %v292 = vpop.trf.xlu0
        %v293 = vpop.trf.xlu0
        %v294 = vpop.trf.xlu0
        %v295 = vld [vmem:[%s1] sm:$0xff]
        %v296 = vld [vmem:[%s1 + $0x8] sm:$0xff]
        %v297 = vld [vmem:[%s2] sm:$0xff]
        %v298 = vld [vmem:[%s2 + $0x8] sm:$0xff]
        %v299 = vmul.f32 %v247, %v247
        %v300 = vmul.f32 %v279, %v279
        %v301 = vmul.f32 %v248, %v248
        %v302 = vmul.f32 %v280, %v280
        %v303 = vmul.f32 %v249, %v249
        %v304 = vmul.f32 %v281, %v281
        %v305 = vmul.f32 %v250, %v250
        %v306 = vmul.f32 %v282, %v282
        %vm307 = vcmask 261120
        %v309 = vsel %vm307, %v297, 0
        %v312 = vsel %vm307, %v298, 0
        %v314 = vand.u32 %v300, 4294901760
        %315 = vmatprep.subr.mxu0 %v314
        %v316 = vand.u32 %v299, 4294901760
        %317 = vmatpush1.msra.mxu0 %v316
        %v318 = vand.u32 %v302, 4294901760
        %319 = vmatprep.subr.mxu0 %v318
        %v320 = vand.u32 %v301, 4294901760
        %321 = vmatpush1.msra.mxu0 %v320
        %v322 = vand.u32 %v304, 4294901760
        %323 = vmatprep.subr.mxu0 %v322
        %v324 = vand.u32 %v303, 4294901760
        %325 = vmatpush1.msra.mxu0 %v324
        %v326 = vand.u32 %v306, 4294901760
        %327 = vmatprep.subr.mxu0 %v326
        %v328 = vand.u32 %v305, 4294901760
        %329 = vmatpush1.msra.mxu0 %v328
        %330 = vmatprep.subr.mxu0 0.0
        %331 = vmatpush1.msra.mxu0 0.0
        %332 = vmatprep.subr.mxu0 0.0
        %333 = vmatpush1.msra.mxu0 0.0
        %334 = vmatprep.subr.mxu0 0.0
        %335 = vmatpush1.msra.mxu0 0.0
        %336 = vmatprep.subr.mxu0 0.0
        %337 = vmatpush1.msra.mxu0 0.0
        %338 = vmatprep.subr.mxu0 0.0
        %339 = vmatpush1.msra.mxu0 0.0
        %340 = vmatprep.subr.mxu0 0.0
        %341 = vmatpush1.msra.mxu0 0.0
        %342 = vmatprep.subr.mxu0 0.0
        %343 = vmatpush1.msra.mxu0 0.0
        %344 = vmatprep.subr.mxu0 0.0
        %345 = vmatpush1.msra.mxu0 0.0
        %346 = vmatprep.subr.mxu0 0.0
        %347 = vmatpush1.msra.mxu0 0.0
        %348 = vmatprep.subr.mxu0 0.0
        %349 = vmatpush1.msra.mxu0 0.0
        %350 = vmatprep.subr.mxu0 0.0
        %351 = vmatpush1.msra.mxu0 0.0
        %352 = vmatprep.subr.mxu0 0.0
        %353 = vmatpush1.msra.mxu0 0.0
        %354 = vmatprep.subr.mxu0 0.0
        %355 = vmatpush1.msra.mxu0 0.0
        %356 = vmatprep.subr.mxu0 0.0
        %357 = vmatpush1.msra.mxu0 0.0
        %358 = vmatprep.subr.mxu0 0.0
        %359 = vmatpush1.msra.mxu0 0.0
        %360 = vmatprep.subr.mxu0 0.0
        %361 = vmatpush1.msra.mxu0 0.0
        %362 = vmatprep.subr.mxu0 0.0
        %363 = vmatpush1.msra.mxu0 0.0
        %364 = vmatprep.subr.mxu0 0.0
        %365 = vmatpush1.msra.mxu0 0.0
        %366 = vmatprep.subr.mxu0 0.0
        %367 = vmatpush1.msra.mxu0 0.0
        %368 = vmatprep.subr.mxu0 0.0
        %369 = vmatpush1.msra.mxu0 0.0
        %370 = vmatprep.subr.mxu0 0.0
        %371 = vmatpush1.msra.mxu0 0.0
        %372 = vmatprep.subr.mxu0 0.0
        %373 = vmatpush1.msra.mxu0 0.0
        %374 = vmatprep.subr.mxu0 0.0
        %375 = vmatpush1.msra.mxu0 0.0
        %376 = vmatprep.subr.mxu0 0.0
        %377 = vmatpush1.msra.mxu0 0.0
        %378 = vmatprep.subr.mxu0 0.0
        %379 = vmatpush1.msra.mxu0 0.0
        %380 = vmatprep.subr.mxu0 0.0
        %381 = vmatpush1.msra.mxu0 0.0
        %382 = vmatprep.subr.mxu0 0.0
        %383 = vmatpush1.msra.mxu0 0.0
        %384 = vmatprep.subr.mxu0 0.0
        %385 = vmatpush1.msra.mxu0 0.0
        %386 = vmatprep.mubr.f32.mxu0 0.0
        %v387 = vand.u32 %v309, 4294901760
        %v388 = vsub.f32 %v309, %v387
        %v389 = vand.u32 %v388, 4294901760
        %v390 = vsub.f32 %v388, %v389
        %v391 = vand.u32 %v390, 4294901760
        %392 = vmatmul.mubr.f32.gmra.mrb[0].mxu0 %v391
        %v393 = vpop.f32.mrb[0].mxu0
        %v394 = vadd.f32 0.0, %v393
        %v395 = vpop.f32.mrb[0].mxu0
        %v396 = vadd.f32 0.0, %v395
        %397 = vmatprep.mubr.f32.mxu0 0.0
        %v398 = vand.u32 %v312, 4294901760
        %v399 = vsub.f32 %v312, %v398
        %v400 = vand.u32 %v399, 4294901760
        %v401 = vsub.f32 %v399, %v400
        %v402 = vand.u32 %v401, 4294901760
        %403 = vmatmul.mubr.f32.gmra.mrb[0].mxu0 %v402
        %v404 = vpop.f32.mrb[0].mxu0
        %v405 = vadd.f32 0.0, %v404
        %v406 = vpop.f32.mrb[0].mxu0
        %v407 = vadd.f32 0.0, %v406
        %408 = vdwg.mxu0
        %v409 = vand.u32 %v300, 4294901760
        %v410 = vsub.f32 %v300, %v409
        %v411 = vand.u32 %v410, 4294901760
        %v412 = vsub.f32 %v410, %v411
        %v413 = vand.u32 %v412, 4294901760
        %414 = vmatprep.subr.mxu0 %v413
        %v415 = vand.u32 %v299, 4294901760
        %v416 = vsub.f32 %v299, %v415
        %v417 = vand.u32 %v416, 4294901760
        %v418 = vsub.f32 %v416, %v417
        %v419 = vand.u32 %v418, 4294901760
        %420 = vmatpush1.msra.mxu0 %v419
        %v421 = vand.u32 %v302, 4294901760
        %v422 = vsub.f32 %v302, %v421
        %v423 = vand.u32 %v422, 4294901760
        %v424 = vsub.f32 %v422, %v423
        %v425 = vand.u32 %v424, 4294901760
        %426 = vmatprep.subr.mxu0 %v425
        %v427 = vand.u32 %v301, 4294901760
        %v428 = vsub.f32 %v301, %v427
        %v429 = vand.u32 %v428, 4294901760
        %v430 = vsub.f32 %v428, %v429
        %v431 = vand.u32 %v430, 4294901760
        %432 = vmatpush1.msra.mxu0 %v431
        %v433 = vand.u32 %v304, 4294901760
        %v434 = vsub.f32 %v304, %v433
        %v435 = vand.u32 %v434, 4294901760
        %v436 = vsub.f32 %v434, %v435
        %v437 = vand.u32 %v436, 4294901760
        %438 = vmatprep.subr.mxu0 %v437
        %v439 = vand.u32 %v303, 4294901760
        %v440 = vsub.f32 %v303, %v439
        %v441 = vand.u32 %v440, 4294901760
        %v442 = vsub.f32 %v440, %v441
        %v443 = vand.u32 %v442, 4294901760
        %444 = vmatpush1.msra.mxu0 %v443
        %v445 = vand.u32 %v306, 4294901760
        %v446 = vsub.f32 %v306, %v445
        %v447 = vand.u32 %v446, 4294901760
        %v448 = vsub.f32 %v446, %v447
        %v449 = vand.u32 %v448, 4294901760
        %450 = vmatprep.subr.mxu0 %v449
        %v451 = vand.u32 %v305, 4294901760
        %v452 = vsub.f32 %v305, %v451
        %v453 = vand.u32 %v452, 4294901760
        %v454 = vsub.f32 %v452, %v453
        %v455 = vand.u32 %v454, 4294901760
        %456 = vmatpush1.msra.mxu0 %v455
        %457 = vmatprep.subr.mxu0 0.0
        %458 = vmatpush1.msra.mxu0 0.0
        %459 = vmatprep.subr.mxu0 0.0
        %460 = vmatpush1.msra.mxu0 0.0
        %461 = vmatprep.subr.mxu0 0.0
        %462 = vmatpush1.msra.mxu0 0.0
        %463 = vmatprep.subr.mxu0 0.0
        %464 = vmatpush1.msra.mxu0 0.0
        %465 = vmatprep.subr.mxu0 0.0
        %466 = vmatpush1.msra.mxu0 0.0
        %467 = vmatprep.subr.mxu0 0.0
        %468 = vmatpush1.msra.mxu0 0.0
        %469 = vmatprep.subr.mxu0 0.0
        %470 = vmatpush1.msra.mxu0 0.0
        %471 = vmatprep.subr.mxu0 0.0
        %472 = vmatpush1.msra.mxu0 0.0
        %473 = vmatprep.subr.mxu0 0.0
        %474 = vmatpush1.msra.mxu0 0.0
        %475 = vmatprep.subr.mxu0 0.0
        %476 = vmatpush1.msra.mxu0 0.0
        %477 = vmatprep.subr.mxu0 0.0
        %478 = vmatpush1.msra.mxu0 0.0
        %479 = vmatprep.subr.mxu0 0.0
        %480 = vmatpush1.msra.mxu0 0.0
        %481 = vmatprep.subr.mxu0 0.0
        %482 = vmatpush1.msra.mxu0 0.0
        %483 = vmatprep.subr.mxu0 0.0
        %484 = vmatpush1.msra.mxu0 0.0
        %485 = vmatprep.subr.mxu0 0.0
        %486 = vmatpush1.msra.mxu0 0.0
        %487 = vmatprep.subr.mxu0 0.0
        %488 = vmatpush1.msra.mxu0 0.0
        %489 = vmatprep.subr.mxu0 0.0
        %490 = vmatpush1.msra.mxu0 0.0
        %491 = vmatprep.subr.mxu0 0.0
        %492 = vmatpush1.msra.mxu0 0.0
        %493 = vmatprep.subr.mxu0 0.0
        %494 = vmatpush1.msra.mxu0 0.0
        %495 = vmatprep.subr.mxu0 0.0
        %496 = vmatpush1.msra.mxu0 0.0
        %497 = vmatprep.subr.mxu0 0.0
        %498 = vmatpush1.msra.mxu0 0.0
        %499 = vmatprep.subr.mxu0 0.0
        %500 = vmatpush1.msra.mxu0 0.0
        %501 = vmatprep.subr.mxu0 0.0
        %502 = vmatpush1.msra.mxu0 0.0
        %503 = vmatprep.subr.mxu0 0.0
        %504 = vmatpush1.msra.mxu0 0.0
        %505 = vmatprep.subr.mxu0 0.0
        %506 = vmatpush1.msra.mxu0 0.0
        %507 = vmatprep.subr.mxu0 0.0
        %508 = vmatpush1.msra.mxu0 0.0
        %509 = vmatprep.subr.mxu0 0.0
        %510 = vmatpush1.msra.mxu0 0.0
        %511 = vmatprep.subr.mxu0 0.0
        %512 = vmatpush1.msra.mxu0 0.0
        %513 = vmatprep.mubr.f32.mxu0 0.0
        %v514 = vand.u32 %v309, 4294901760
        %515 = vmatmul.mubr.f32.gmra.mrb[0].mxu0 %v514
        %v516 = vpop.f32.mrb[0].mxu0
        %v517 = vadd.f32 %v394, %v516
        %v518 = vpop.f32.mrb[0].mxu0
        %v519 = vadd.f32 %v396, %v518
        %520 = vmatprep.mubr.f32.mxu0 0.0
        %v521 = vand.u32 %v312, 4294901760
        %522 = vmatmul.mubr.f32.gmra.mrb[0].mxu0 %v521
        %v523 = vpop.f32.mrb[0].mxu0
        %v524 = vadd.f32 %v405, %v523
        %v525 = vpop.f32.mrb[0].mxu0
        %v526 = vadd.f32 %v407, %v525
        %527 = vdwg.mxu0
        %v528 = vand.u32 %v300, 4294901760
        %v529 = vsub.f32 %v300, %v528
        %530 = vmatprep.subr.mxu0 %v529
        %v531 = vand.u32 %v299, 4294901760
        %v532 = vsub.f32 %v299, %v531
        %533 = vmatpush1.msra.mxu0 %v532
        %v534 = vand.u32 %v302, 4294901760
        %v535 = vsub.f32 %v302, %v534
        %536 = vmatprep.subr.mxu0 %v535
        %v537 = vand.u32 %v301, 4294901760
        %v538 = vsub.f32 %v301, %v537
        %539 = vmatpush1.msra.mxu0 %v538
        %v540 = vand.u32 %v304, 4294901760
        %v541 = vsub.f32 %v304, %v540
        %542 = vmatprep.subr.mxu0 %v541
        %v543 = vand.u32 %v303, 4294901760
        %v544 = vsub.f32 %v303, %v543
        %545 = vmatpush1.msra.mxu0 %v544
        %v546 = vand.u32 %v306, 4294901760
        %v547 = vsub.f32 %v306, %v546
        %548 = vmatprep.subr.mxu0 %v547
        %v549 = vand.u32 %v305, 4294901760
        %v550 = vsub.f32 %v305, %v549
        %551 = vmatpush1.msra.mxu0 %v550
        %552 = vmatprep.subr.mxu0 0.0
        %553 = vmatpush1.msra.mxu0 0.0
        %554 = vmatprep.subr.mxu0 0.0
        %555 = vmatpush1.msra.mxu0 0.0
        %556 = vmatprep.subr.mxu0 0.0
        %557 = vmatpush1.msra.mxu0 0.0
        %558 = vmatprep.subr.mxu0 0.0
        %559 = vmatpush1.msra.mxu0 0.0
        %560 = vmatprep.subr.mxu0 0.0
        %561 = vmatpush1.msra.mxu0 0.0
        %562 = vmatprep.subr.mxu0 0.0
        %563 = vmatpush1.msra.mxu0 0.0
        %564 = vmatprep.subr.mxu0 0.0
        %565 = vmatpush1.msra.mxu0 0.0
        %566 = vmatprep.subr.mxu0 0.0
        %567 = vmatpush1.msra.mxu0 0.0
        %568 = vmatprep.subr.mxu0 0.0
        %569 = vmatpush1.msra.mxu0 0.0
        %570 = vmatprep.subr.mxu0 0.0
        %571 = vmatpush1.msra.mxu0 0.0
        %572 = vmatprep.subr.mxu0 0.0
        %573 = vmatpush1.msra.mxu0 0.0
        %574 = vmatprep.subr.mxu0 0.0
        %575 = vmatpush1.msra.mxu0 0.0
        %576 = vmatprep.subr.mxu0 0.0
        %577 = vmatpush1.msra.mxu0 0.0
        %578 = vmatprep.subr.mxu0 0.0
        %579 = vmatpush1.msra.mxu0 0.0
        %580 = vmatprep.subr.mxu0 0.0
        %581 = vmatpush1.msra.mxu0 0.0
        %582 = vmatprep.subr.mxu0 0.0
        %583 = vmatpush1.msra.mxu0 0.0
        %584 = vmatprep.subr.mxu0 0.0
        %585 = vmatpush1.msra.mxu0 0.0
        %586 = vmatprep.subr.mxu0 0.0
        %587 = vmatpush1.msra.mxu0 0.0
        %588 = vmatprep.subr.mxu0 0.0
        %589 = vmatpush1.msra.mxu0 0.0
        %590 = vmatprep.subr.mxu0 0.0
        %591 = vmatpush1.msra.mxu0 0.0
        %592 = vmatprep.subr.mxu0 0.0
        %593 = vmatpush1.msra.mxu0 0.0
        %594 = vmatprep.subr.mxu0 0.0
        %595 = vmatpush1.msra.mxu0 0.0
        %596 = vmatprep.subr.mxu0 0.0
        %597 = vmatpush1.msra.mxu0 0.0
        %598 = vmatprep.subr.mxu0 0.0
        %599 = vmatpush1.msra.mxu0 0.0
        %600 = vmatprep.subr.mxu0 0.0
        %601 = vmatpush1.msra.mxu0 0.0
        %602 = vmatprep.subr.mxu0 0.0
        %603 = vmatpush1.msra.mxu0 0.0
        %604 = vmatprep.subr.mxu0 0.0
        %605 = vmatpush1.msra.mxu0 0.0
        %606 = vmatprep.subr.mxu0 0.0
        %607 = vmatpush1.msra.mxu0 0.0
        %608 = vmatprep.mubr.f32.mxu0 0.0
        %v609 = vand.u32 %v309, 4294901760
        %v610 = vsub.f32 %v309, %v609
        %611 = vmatmul.mubr.f32.gmra.mrb[0].mxu0 %v610
        %v612 = vpop.f32.mrb[0].mxu0
        %v613 = vadd.f32 %v517, %v612
        %v614 = vpop.f32.mrb[0].mxu0
        %v615 = vadd.f32 %v519, %v614
        %616 = vmatprep.mubr.f32.mxu0 0.0
        %v617 = vand.u32 %v312, 4294901760
        %v618 = vsub.f32 %v312, %v617
        %619 = vmatmul.mubr.f32.gmra.mrb[0].mxu0 %v618
        %v620 = vpop.f32.mrb[0].mxu0
        %v621 = vadd.f32 %v524, %v620
        %v622 = vpop.f32.mrb[0].mxu0
        %v623 = vadd.f32 %v526, %v622
        %624 = vdwg.mxu0
        %v625 = vand.u32 %v300, 4294901760
        %626 = vmatprep.subr.mxu0 %v625
        %v627 = vand.u32 %v299, 4294901760
        %628 = vmatpush1.msra.mxu0 %v627
        %v629 = vand.u32 %v302, 4294901760
        %630 = vmatprep.subr.mxu0 %v629
        %v631 = vand.u32 %v301, 4294901760
        %632 = vmatpush1.msra.mxu0 %v631
        %v633 = vand.u32 %v304, 4294901760
        %634 = vmatprep.subr.mxu0 %v633
        %v635 = vand.u32 %v303, 4294901760
        %636 = vmatpush1.msra.mxu0 %v635
        %v637 = vand.u32 %v306, 4294901760
        %638 = vmatprep.subr.mxu0 %v637
        %v639 = vand.u32 %v305, 4294901760
        %640 = vmatpush1.msra.mxu0 %v639
        %641 = vmatprep.subr.mxu0 0.0
        %642 = vmatpush1.msra.mxu0 0.0
        %643 = vmatprep.subr.mxu0 0.0
        %644 = vmatpush1.msra.mxu0 0.0
        %645 = vmatprep.subr.mxu0 0.0
        %646 = vmatpush1.msra.mxu0 0.0
        %647 = vmatprep.subr.mxu0 0.0
        %648 = vmatpush1.msra.mxu0 0.0
        %649 = vmatprep.subr.mxu0 0.0
        %650 = vmatpush1.msra.mxu0 0.0
        %651 = vmatprep.subr.mxu0 0.0
        %652 = vmatpush1.msra.mxu0 0.0
        %653 = vmatprep.subr.mxu0 0.0
        %654 = vmatpush1.msra.mxu0 0.0
        %655 = vmatprep.subr.mxu0 0.0
        %656 = vmatpush1.msra.mxu0 0.0
        %657 = vmatprep.subr.mxu0 0.0
        %658 = vmatpush1.msra.mxu0 0.0
        %659 = vmatprep.subr.mxu0 0.0
        %660 = vmatpush1.msra.mxu0 0.0
        %661 = vmatprep.subr.mxu0 0.0
        %662 = vmatpush1.msra.mxu0 0.0
        %663 = vmatprep.subr.mxu0 0.0
        %664 = vmatpush1.msra.mxu0 0.0
        %665 = vmatprep.subr.mxu0 0.0
        %666 = vmatpush1.msra.mxu0 0.0
        %667 = vmatprep.subr.mxu0 0.0
        %668 = vmatpush1.msra.mxu0 0.0
        %669 = vmatprep.subr.mxu0 0.0
        %670 = vmatpush1.msra.mxu0 0.0
        %671 = vmatprep.subr.mxu0 0.0
        %672 = vmatpush1.msra.mxu0 0.0
        %673 = vmatprep.subr.mxu0 0.0
        %674 = vmatpush1.msra.mxu0 0.0
        %675 = vmatprep.subr.mxu0 0.0
        %676 = vmatpush1.msra.mxu0 0.0
        %677 = vmatprep.subr.mxu0 0.0
        %678 = vmatpush1.msra.mxu0 0.0
        %679 = vmatprep.subr.mxu0 0.0
        %680 = vmatpush1.msra.mxu0 0.0
        %681 = vmatprep.subr.mxu0 0.0
        %682 = vmatpush1.msra.mxu0 0.0
        %683 = vmatprep.subr.mxu0 0.0
        %684 = vmatpush1.msra.mxu0 0.0
        %685 = vmatprep.subr.mxu0 0.0
        %686 = vmatpush1.msra.mxu0 0.0
        %687 = vmatprep.subr.mxu0 0.0
        %688 = vmatpush1.msra.mxu0 0.0
        %689 = vmatprep.subr.mxu0 0.0
        %690 = vmatpush1.msra.mxu0 0.0
        %691 = vmatprep.subr.mxu0 0.0
        %692 = vmatpush1.msra.mxu0 0.0
        %693 = vmatprep.subr.mxu0 0.0
        %694 = vmatpush1.msra.mxu0 0.0
        %695 = vmatprep.subr.mxu0 0.0
        %696 = vmatpush1.msra.mxu0 0.0
        %697 = vmatprep.mubr.f32.mxu0 0.0
        %v698 = vand.u32 %v309, 4294901760
        %v699 = vsub.f32 %v309, %v698
        %v700 = vand.u32 %v699, 4294901760
        %701 = vmatmul.mubr.f32.gmra.mrb[0].mxu0 %v700
        %v702 = vpop.f32.mrb[0].mxu0
        %v703 = vadd.f32 %v613, %v702
        %v704 = vpop.f32.mrb[0].mxu0
        %v705 = vadd.f32 %v615, %v704
        %706 = vmatprep.mubr.f32.mxu0 0.0
        %v707 = vand.u32 %v312, 4294901760
        %v708 = vsub.f32 %v312, %v707
        %v709 = vand.u32 %v708, 4294901760
        %710 = vmatmul.mubr.f32.gmra.mrb[0].mxu0 %v709
        %v711 = vpop.f32.mrb[0].mxu0
        %v712 = vadd.f32 %v621, %v711
        %v713 = vpop.f32.mrb[0].mxu0
        %v714 = vadd.f32 %v623, %v713
        %715 = vdwg.mxu0
        %v716 = vand.u32 %v300, 4294901760
        %v717 = vsub.f32 %v300, %v716
        %v718 = vand.u32 %v717, 4294901760
        %719 = vmatprep.subr.mxu0 %v718
        %v720 = vand.u32 %v299, 4294901760
        %v721 = vsub.f32 %v299, %v720
        %v722 = vand.u32 %v721, 4294901760
        %723 = vmatpush1.msra.mxu0 %v722
        %v724 = vand.u32 %v302, 4294901760
        %v725 = vsub.f32 %v302, %v724
        %v726 = vand.u32 %v725, 4294901760
        %727 = vmatprep.subr.mxu0 %v726
        %v728 = vand.u32 %v301, 4294901760
        %v729 = vsub.f32 %v301, %v728
        %v730 = vand.u32 %v729, 4294901760
        %731 = vmatpush1.msra.mxu0 %v730
        %v732 = vand.u32 %v304, 4294901760
        %v733 = vsub.f32 %v304, %v732
        %v734 = vand.u32 %v733, 4294901760
        %735 = vmatprep.subr.mxu0 %v734
        %v736 = vand.u32 %v303, 4294901760
        %v737 = vsub.f32 %v303, %v736
        %v738 = vand.u32 %v737, 4294901760
        %739 = vmatpush1.msra.mxu0 %v738
        %v740 = vand.u32 %v306, 4294901760
        %v741 = vsub.f32 %v306, %v740
        %v742 = vand.u32 %v741, 4294901760
        %743 = vmatprep.subr.mxu0 %v742
        %v744 = vand.u32 %v305, 4294901760
        %v745 = vsub.f32 %v305, %v744
        %v746 = vand.u32 %v745, 4294901760
        %747 = vmatpush1.msra.mxu0 %v746
        %748 = vmatprep.subr.mxu0 0.0
        %749 = vmatpush1.msra.mxu0 0.0
        %750 = vmatprep.subr.mxu0 0.0
        %751 = vmatpush1.msra.mxu0 0.0
        %752 = vmatprep.subr.mxu0 0.0
        %753 = vmatpush1.msra.mxu0 0.0
        %754 = vmatprep.subr.mxu0 0.0
        %755 = vmatpush1.msra.mxu0 0.0
        %756 = vmatprep.subr.mxu0 0.0
        %757 = vmatpush1.msra.mxu0 0.0
        %758 = vmatprep.subr.mxu0 0.0
        %759 = vmatpush1.msra.mxu0 0.0
        %760 = vmatprep.subr.mxu0 0.0
        %761 = vmatpush1.msra.mxu0 0.0
        %762 = vmatprep.subr.mxu0 0.0
        %763 = vmatpush1.msra.mxu0 0.0
        %764 = vmatprep.subr.mxu0 0.0
        %765 = vmatpush1.msra.mxu0 0.0
        %766 = vmatprep.subr.mxu0 0.0
        %767 = vmatpush1.msra.mxu0 0.0
        %768 = vmatprep.subr.mxu0 0.0
        %769 = vmatpush1.msra.mxu0 0.0
        %770 = vmatprep.subr.mxu0 0.0
        %771 = vmatpush1.msra.mxu0 0.0
        %772 = vmatprep.subr.mxu0 0.0
        %773 = vmatpush1.msra.mxu0 0.0
        %774 = vmatprep.subr.mxu0 0.0
        %775 = vmatpush1.msra.mxu0 0.0
        %776 = vmatprep.subr.mxu0 0.0
        %777 = vmatpush1.msra.mxu0 0.0
        %778 = vmatprep.subr.mxu0 0.0
        %779 = vmatpush1.msra.mxu0 0.0
        %780 = vmatprep.subr.mxu0 0.0
        %781 = vmatpush1.msra.mxu0 0.0
        %782 = vmatprep.subr.mxu0 0.0
        %783 = vmatpush1.msra.mxu0 0.0
        %784 = vmatprep.subr.mxu0 0.0
        %785 = vmatpush1.msra.mxu0 0.0
        %786 = vmatprep.subr.mxu0 0.0
        %787 = vmatpush1.msra.mxu0 0.0
        %788 = vmatprep.subr.mxu0 0.0
        %789 = vmatpush1.msra.mxu0 0.0
        %790 = vmatprep.subr.mxu0 0.0
        %791 = vmatpush1.msra.mxu0 0.0
        %792 = vmatprep.subr.mxu0 0.0
        %793 = vmatpush1.msra.mxu0 0.0
        %794 = vmatprep.subr.mxu0 0.0
        %795 = vmatpush1.msra.mxu0 0.0
        %796 = vmatprep.subr.mxu0 0.0
        %797 = vmatpush1.msra.mxu0 0.0
        %798 = vmatprep.subr.mxu0 0.0
        %799 = vmatpush1.msra.mxu0 0.0
        %800 = vmatprep.subr.mxu0 0.0
        %801 = vmatpush1.msra.mxu0 0.0
        %802 = vmatprep.subr.mxu0 0.0
        %803 = vmatpush1.msra.mxu0 0.0
        %804 = vmatprep.mubr.f32.mxu0 0.0
        %v805 = vand.u32 %v309, 4294901760
        %806 = vmatmul.mubr.f32.gmra.mrb[0].mxu0 %v805
        %v807 = vpop.f32.mrb[0].mxu0
        %v808 = vadd.f32 %v703, %v807
        %v809 = vpop.f32.mrb[0].mxu0
        %v810 = vadd.f32 %v705, %v809
        %811 = vmatprep.mubr.f32.mxu0 0.0
        %v812 = vand.u32 %v312, 4294901760
        %813 = vmatmul.mubr.f32.gmra.mrb[0].mxu0 %v812
        %v814 = vpop.f32.mrb[0].mxu0
        %v815 = vadd.f32 %v712, %v814
        %v816 = vpop.f32.mrb[0].mxu0
        %v817 = vadd.f32 %v714, %v816
        %818 = vdwg.mxu0
        %v819 = vand.u32 %v300, 4294901760
        %820 = vmatprep.subr.mxu0 %v819
        %v821 = vand.u32 %v299, 4294901760
        %822 = vmatpush1.msra.mxu0 %v821
        %v823 = vand.u32 %v302, 4294901760
        %824 = vmatprep.subr.mxu0 %v823
        %v825 = vand.u32 %v301, 4294901760
        %826 = vmatpush1.msra.mxu0 %v825
        %v827 = vand.u32 %v304, 4294901760
        %828 = vmatprep.subr.mxu0 %v827
        %v829 = vand.u32 %v303, 4294901760
        %830 = vmatpush1.msra.mxu0 %v829
        %v831 = vand.u32 %v306, 4294901760
        %832 = vmatprep.subr.mxu0 %v831
        %v833 = vand.u32 %v305, 4294901760
        %834 = vmatpush1.msra.mxu0 %v833
        %835 = vmatprep.subr.mxu0 0.0
        %836 = vmatpush1.msra.mxu0 0.0
        %837 = vmatprep.subr.mxu0 0.0
        %838 = vmatpush1.msra.mxu0 0.0
        %839 = vmatprep.subr.mxu0 0.0
        %840 = vmatpush1.msra.mxu0 0.0
        %841 = vmatprep.subr.mxu0 0.0
        %842 = vmatpush1.msra.mxu0 0.0
        %843 = vmatprep.subr.mxu0 0.0
        %844 = vmatpush1.msra.mxu0 0.0
        %845 = vmatprep.subr.mxu0 0.0
        %846 = vmatpush1.msra.mxu0 0.0
        %847 = vmatprep.subr.mxu0 0.0
        %848 = vmatpush1.msra.mxu0 0.0
        %849 = vmatprep.subr.mxu0 0.0
        %850 = vmatpush1.msra.mxu0 0.0
        %851 = vmatprep.subr.mxu0 0.0
        %852 = vmatpush1.msra.mxu0 0.0
        %853 = vmatprep.subr.mxu0 0.0
        %854 = vmatpush1.msra.mxu0 0.0
        %855 = vmatprep.subr.mxu0 0.0
        %856 = vmatpush1.msra.mxu0 0.0
        %857 = vmatprep.subr.mxu0 0.0
        %858 = vmatpush1.msra.mxu0 0.0
        %859 = vmatprep.subr.mxu0 0.0
        %860 = vmatpush1.msra.mxu0 0.0
        %861 = vmatprep.subr.mxu0 0.0
        %862 = vmatpush1.msra.mxu0 0.0
        %863 = vmatprep.subr.mxu0 0.0
        %864 = vmatpush1.msra.mxu0 0.0
        %865 = vmatprep.subr.mxu0 0.0
        %866 = vmatpush1.msra.mxu0 0.0
        %867 = vmatprep.subr.mxu0 0.0
        %868 = vmatpush1.msra.mxu0 0.0
        %869 = vmatprep.subr.mxu0 0.0
        %870 = vmatpush1.msra.mxu0 0.0
        %871 = vmatprep.subr.mxu0 0.0
        %872 = vmatpush1.msra.mxu0 0.0
        %873 = vmatprep.subr.mxu0 0.0
        %874 = vmatpush1.msra.mxu0 0.0
        %875 = vmatprep.subr.mxu0 0.0
        %876 = vmatpush1.msra.mxu0 0.0
        %877 = vmatprep.subr.mxu0 0.0
        %878 = vmatpush1.msra.mxu0 0.0
        %879 = vmatprep.subr.mxu0 0.0
        %880 = vmatpush1.msra.mxu0 0.0
        %881 = vmatprep.subr.mxu0 0.0
        %882 = vmatpush1.msra.mxu0 0.0
        %883 = vmatprep.subr.mxu0 0.0
        %884 = vmatpush1.msra.mxu0 0.0
        %885 = vmatprep.subr.mxu0 0.0
        %886 = vmatpush1.msra.mxu0 0.0
        %887 = vmatprep.subr.mxu0 0.0
        %888 = vmatpush1.msra.mxu0 0.0
        %889 = vmatprep.subr.mxu0 0.0
        %890 = vmatpush1.msra.mxu0 0.0
        %891 = vmatprep.mubr.f32.mxu0 0.0
        %v892 = vand.u32 %v309, 4294901760
        %893 = vmatmul.mubr.f32.gmra.mrb[0].mxu0 %v892
        %v894 = vpop.f32.mrb[0].mxu0
        %v895 = vadd.f32 %v808, %v894
        %v896 = vpop.f32.mrb[0].mxu0
        %v897 = vadd.f32 %v810, %v896
        %898 = vmatprep.mubr.f32.mxu0 0.0
        %v899 = vand.u32 %v312, 4294901760
        %900 = vmatmul.mubr.f32.gmra.mrb[0].mxu0 %v899
        %v901 = vpop.f32.mrb[0].mxu0
        %v902 = vadd.f32 %v815, %v901
        %v903 = vpop.f32.mrb[0].mxu0
        %v904 = vadd.f32 %v817, %v903
        %905 = vdwg.mxu0
        %v907 = vsel %vm307, %v295, 0
        %v910 = vsel %vm307, %v296, 0
        %v912 = vand.u32 %v279, 4294901760
        %913 = vmatprep.subr.mxu0 %v912
        %v914 = vand.u32 %v247, 4294901760
        %915 = vmatpush1.msra.mxu0 %v914
        %v916 = vand.u32 %v280, 4294901760
        %917 = vmatprep.subr.mxu0 %v916
        %v918 = vand.u32 %v248, 4294901760
        %919 = vmatpush1.msra.mxu0 %v918
        %v920 = vand.u32 %v281, 4294901760
        %921 = vmatprep.subr.mxu0 %v920
        %v922 = vand.u32 %v249, 4294901760
        %923 = vmatpush1.msra.mxu0 %v922
        %v924 = vand.u32 %v282, 4294901760
        %925 = vmatprep.subr.mxu0 %v924
        %v926 = vand.u32 %v250, 4294901760
        %927 = vmatpush1.msra.mxu0 %v926
        %928 = vmatprep.subr.mxu0 0.0
        %929 = vmatpush1.msra.mxu0 0.0
        %930 = vmatprep.subr.mxu0 0.0
        %931 = vmatpush1.msra.mxu0 0.0
        %932 = vmatprep.subr.mxu0 0.0
        %933 = vmatpush1.msra.mxu0 0.0
        %934 = vmatprep.subr.mxu0 0.0
        %935 = vmatpush1.msra.mxu0 0.0
        %936 = vmatprep.subr.mxu0 0.0
        %937 = vmatpush1.msra.mxu0 0.0
        %938 = vmatprep.subr.mxu0 0.0
        %939 = vmatpush1.msra.mxu0 0.0
        %940 = vmatprep.subr.mxu0 0.0
        %941 = vmatpush1.msra.mxu0 0.0
        %942 = vmatprep.subr.mxu0 0.0
        %943 = vmatpush1.msra.mxu0 0.0
        %944 = vmatprep.subr.mxu0 0.0
        %945 = vmatpush1.msra.mxu0 0.0
        %946 = vmatprep.subr.mxu0 0.0
        %947 = vmatpush1.msra.mxu0 0.0
        %948 = vmatprep.subr.mxu0 0.0
        %949 = vmatpush1.msra.mxu0 0.0
        %950 = vmatprep.subr.mxu0 0.0
        %951 = vmatpush1.msra.mxu0 0.0
        %952 = vmatprep.subr.mxu0 0.0
        %953 = vmatpush1.msra.mxu0 0.0
        %954 = vmatprep.subr.mxu0 0.0
        %955 = vmatpush1.msra.mxu0 0.0
        %956 = vmatprep.subr.mxu0 0.0
        %957 = vmatpush1.msra.mxu0 0.0
        %958 = vmatprep.subr.mxu0 0.0
        %959 = vmatpush1.msra.mxu0 0.0
        %960 = vmatprep.subr.mxu0 0.0
        %961 = vmatpush1.msra.mxu0 0.0
        %962 = vmatprep.subr.mxu0 0.0
        %963 = vmatpush1.msra.mxu0 0.0
        %964 = vmatprep.subr.mxu0 0.0
        %965 = vmatpush1.msra.mxu0 0.0
        %966 = vmatprep.subr.mxu0 0.0
        %967 = vmatpush1.msra.mxu0 0.0
        %968 = vmatprep.subr.mxu0 0.0
        %969 = vmatpush1.msra.mxu0 0.0
        %970 = vmatprep.subr.mxu0 0.0
        %971 = vmatpush1.msra.mxu0 0.0
        %972 = vmatprep.subr.mxu0 0.0
        %973 = vmatpush1.msra.mxu0 0.0
        %974 = vmatprep.subr.mxu0 0.0
        %975 = vmatpush1.msra.mxu0 0.0
        %976 = vmatprep.subr.mxu0 0.0
        %977 = vmatpush1.msra.mxu0 0.0
        %978 = vmatprep.subr.mxu0 0.0
        %979 = vmatpush1.msra.mxu0 0.0
        %980 = vmatprep.subr.mxu0 0.0
        %981 = vmatpush1.msra.mxu0 0.0
        %982 = vmatprep.subr.mxu0 0.0
        %983 = vmatpush1.msra.mxu0 0.0
        %984 = vmatprep.mubr.f32.mxu0 0.0
        %v985 = vand.u32 %v907, 4294901760
        %v986 = vsub.f32 %v907, %v985
        %v987 = vand.u32 %v986, 4294901760
        %v988 = vsub.f32 %v986, %v987
        %v989 = vand.u32 %v988, 4294901760
        %990 = vmatmul.mubr.f32.gmra.mrb[0].mxu0 %v989
        %v991 = vpop.f32.mrb[0].mxu0
        %v992 = vadd.f32 %v895, %v991
        %v993 = vpop.f32.mrb[0].mxu0
        %v994 = vadd.f32 %v897, %v993
        %995 = vmatprep.mubr.f32.mxu0 0.0
        %v996 = vand.u32 %v910, 4294901760
        %v997 = vsub.f32 %v910, %v996
        %v998 = vand.u32 %v997, 4294901760
        %v999 = vsub.f32 %v997, %v998
        %v1000 = vand.u32 %v999, 4294901760
        %1001 = vmatmul.mubr.f32.gmra.mrb[0].mxu0 %v1000
        %v1002 = vpop.f32.mrb[0].mxu0
        %v1003 = vadd.f32 %v902, %v1002
        %v1004 = vpop.f32.mrb[0].mxu0
        %v1005 = vadd.f32 %v904, %v1004
        %1006 = vdwg.mxu0
        %v1007 = vand.u32 %v279, 4294901760
        %v1008 = vsub.f32 %v279, %v1007
        %v1009 = vand.u32 %v1008, 4294901760
        %v1010 = vsub.f32 %v1008, %v1009
        %v1011 = vand.u32 %v1010, 4294901760
        %1012 = vmatprep.subr.mxu0 %v1011
        %v1013 = vand.u32 %v247, 4294901760
        %v1014 = vsub.f32 %v247, %v1013
        %v1015 = vand.u32 %v1014, 4294901760
        %v1016 = vsub.f32 %v1014, %v1015
        %v1017 = vand.u32 %v1016, 4294901760
        %1018 = vmatpush1.msra.mxu0 %v1017
        %v1019 = vand.u32 %v280, 4294901760
        %v1020 = vsub.f32 %v280, %v1019
        %v1021 = vand.u32 %v1020, 4294901760
        %v1022 = vsub.f32 %v1020, %v1021
        %v1023 = vand.u32 %v1022, 4294901760
        %1024 = vmatprep.subr.mxu0 %v1023
        %v1025 = vand.u32 %v248, 4294901760
        %v1026 = vsub.f32 %v248, %v1025
        %v1027 = vand.u32 %v1026, 4294901760
        %v1028 = vsub.f32 %v1026, %v1027
        %v1029 = vand.u32 %v1028, 4294901760
        %1030 = vmatpush1.msra.mxu0 %v1029
        %v1031 = vand.u32 %v281, 4294901760
        %v1032 = vsub.f32 %v281, %v1031
        %v1033 = vand.u32 %v1032, 4294901760
        %v1034 = vsub.f32 %v1032, %v1033
        %v1035 = vand.u32 %v1034, 4294901760
        %1036 = vmatprep.subr.mxu0 %v1035
        %v1037 = vand.u32 %v249, 4294901760
        %v1038 = vsub.f32 %v249, %v1037
        %v1039 = vand.u32 %v1038, 4294901760
        %v1040 = vsub.f32 %v1038, %v1039
        %v1041 = vand.u32 %v1040, 4294901760
        %1042 = vmatpush1.msra.mxu0 %v1041
        %v1043 = vand.u32 %v282, 4294901760
        %v1044 = vsub.f32 %v282, %v1043
        %v1045 = vand.u32 %v1044, 4294901760
        %v1046 = vsub.f32 %v1044, %v1045
        %v1047 = vand.u32 %v1046, 4294901760
        %1048 = vmatprep.subr.mxu0 %v1047
        %v1049 = vand.u32 %v250, 4294901760
        %v1050 = vsub.f32 %v250, %v1049
        %v1051 = vand.u32 %v1050, 4294901760
        %v1052 = vsub.f32 %v1050, %v1051
        %v1053 = vand.u32 %v1052, 4294901760
        %1054 = vmatpush1.msra.mxu0 %v1053
        %1055 = vmatprep.subr.mxu0 0.0
        %1056 = vmatpush1.msra.mxu0 0.0
        %1057 = vmatprep.subr.mxu0 0.0
        %1058 = vmatpush1.msra.mxu0 0.0
        %1059 = vmatprep.subr.mxu0 0.0
        %1060 = vmatpush1.msra.mxu0 0.0
        %1061 = vmatprep.subr.mxu0 0.0
        %1062 = vmatpush1.msra.mxu0 0.0
        %1063 = vmatprep.subr.mxu0 0.0
        %1064 = vmatpush1.msra.mxu0 0.0
        %1065 = vmatprep.subr.mxu0 0.0
        %1066 = vmatpush1.msra.mxu0 0.0
        %1067 = vmatprep.subr.mxu0 0.0
        %1068 = vmatpush1.msra.mxu0 0.0
        %1069 = vmatprep.subr.mxu0 0.0
        %1070 = vmatpush1.msra.mxu0 0.0
        %1071 = vmatprep.subr.mxu0 0.0
        %1072 = vmatpush1.msra.mxu0 0.0
        %1073 = vmatprep.subr.mxu0 0.0
        %1074 = vmatpush1.msra.mxu0 0.0
        %1075 = vmatprep.subr.mxu0 0.0
        %1076 = vmatpush1.msra.mxu0 0.0
        %1077 = vmatprep.subr.mxu0 0.0
        %1078 = vmatpush1.msra.mxu0 0.0
        %1079 = vmatprep.subr.mxu0 0.0
        %1080 = vmatpush1.msra.mxu0 0.0
        %1081 = vmatprep.subr.mxu0 0.0
        %1082 = vmatpush1.msra.mxu0 0.0
        %1083 = vmatprep.subr.mxu0 0.0
        %1084 = vmatpush1.msra.mxu0 0.0
        %1085 = vmatprep.subr.mxu0 0.0
        %1086 = vmatpush1.msra.mxu0 0.0
        %1087 = vmatprep.subr.mxu0 0.0
        %1088 = vmatpush1.msra.mxu0 0.0
        %1089 = vmatprep.subr.mxu0 0.0
        %1090 = vmatpush1.msra.mxu0 0.0
        %1091 = vmatprep.subr.mxu0 0.0
        %1092 = vmatpush1.msra.mxu0 0.0
        %1093 = vmatprep.subr.mxu0 0.0
        %1094 = vmatpush1.msra.mxu0 0.0
        %1095 = vmatprep.subr.mxu0 0.0
        %1096 = vmatpush1.msra.mxu0 0.0
        %1097 = vmatprep.subr.mxu0 0.0
        %1098 = vmatpush1.msra.mxu0 0.0
        %1099 = vmatprep.subr.mxu0 0.0
        %1100 = vmatpush1.msra.mxu0 0.0
        %1101 = vmatprep.subr.mxu0 0.0
        %1102 = vmatpush1.msra.mxu0 0.0
        %1103 = vmatprep.subr.mxu0 0.0
        %1104 = vmatpush1.msra.mxu0 0.0
        %1105 = vmatprep.subr.mxu0 0.0
        %1106 = vmatpush1.msra.mxu0 0.0
        %1107 = vmatprep.subr.mxu0 0.0
        %1108 = vmatpush1.msra.mxu0 0.0
        %1109 = vmatprep.subr.mxu0 0.0
        %1110 = vmatpush1.msra.mxu0 0.0
        %1111 = vmatprep.mubr.f32.mxu0 0.0
        %v1112 = vand.u32 %v907, 4294901760
        %1113 = vmatmul.mubr.f32.gmra.mrb[0].mxu0 %v1112
        %v1114 = vpop.f32.mrb[0].mxu0
        %v1115 = vadd.f32 %v992, %v1114
        %v1116 = vpop.f32.mrb[0].mxu0
        %v1117 = vadd.f32 %v994, %v1116
        %1118 = vmatprep.mubr.f32.mxu0 0.0
        %v1119 = vand.u32 %v910, 4294901760
        %1120 = vmatmul.mubr.f32.gmra.mrb[0].mxu0 %v1119
        %v1121 = vpop.f32.mrb[0].mxu0
        %v1122 = vadd.f32 %v1003, %v1121
        %v1123 = vpop.f32.mrb[0].mxu0
        %v1124 = vadd.f32 %v1005, %v1123
        %1125 = vdwg.mxu0
        %v1126 = vand.u32 %v279, 4294901760
        %v1127 = vsub.f32 %v279, %v1126
        %1128 = vmatprep.subr.mxu0 %v1127
        %v1129 = vand.u32 %v247, 4294901760
        %v1130 = vsub.f32 %v247, %v1129
        %1131 = vmatpush1.msra.mxu0 %v1130
        %v1132 = vand.u32 %v280, 4294901760
        %v1133 = vsub.f32 %v280, %v1132
        %1134 = vmatprep.subr.mxu0 %v1133
        %v1135 = vand.u32 %v248, 4294901760
        %v1136 = vsub.f32 %v248, %v1135
        %1137 = vmatpush1.msra.mxu0 %v1136
        %v1138 = vand.u32 %v281, 4294901760
        %v1139 = vsub.f32 %v281, %v1138
        %1140 = vmatprep.subr.mxu0 %v1139
        %v1141 = vand.u32 %v249, 4294901760
        %v1142 = vsub.f32 %v249, %v1141
        %1143 = vmatpush1.msra.mxu0 %v1142
        %v1144 = vand.u32 %v282, 4294901760
        %v1145 = vsub.f32 %v282, %v1144
        %1146 = vmatprep.subr.mxu0 %v1145
        %v1147 = vand.u32 %v250, 4294901760
        %v1148 = vsub.f32 %v250, %v1147
        %1149 = vmatpush1.msra.mxu0 %v1148
        %1150 = vmatprep.subr.mxu0 0.0
        %1151 = vmatpush1.msra.mxu0 0.0
        %1152 = vmatprep.subr.mxu0 0.0
        %1153 = vmatpush1.msra.mxu0 0.0
        %1154 = vmatprep.subr.mxu0 0.0
        %1155 = vmatpush1.msra.mxu0 0.0
        %1156 = vmatprep.subr.mxu0 0.0
        %1157 = vmatpush1.msra.mxu0 0.0
        %1158 = vmatprep.subr.mxu0 0.0
        %1159 = vmatpush1.msra.mxu0 0.0
        %1160 = vmatprep.subr.mxu0 0.0
        %1161 = vmatpush1.msra.mxu0 0.0
        %1162 = vmatprep.subr.mxu0 0.0
        %1163 = vmatpush1.msra.mxu0 0.0
        %1164 = vmatprep.subr.mxu0 0.0
        %1165 = vmatpush1.msra.mxu0 0.0
        %1166 = vmatprep.subr.mxu0 0.0
        %1167 = vmatpush1.msra.mxu0 0.0
        %1168 = vmatprep.subr.mxu0 0.0
        %1169 = vmatpush1.msra.mxu0 0.0
        %1170 = vmatprep.subr.mxu0 0.0
        %1171 = vmatpush1.msra.mxu0 0.0
        %1172 = vmatprep.subr.mxu0 0.0
        %1173 = vmatpush1.msra.mxu0 0.0
        %1174 = vmatprep.subr.mxu0 0.0
        %1175 = vmatpush1.msra.mxu0 0.0
        %1176 = vmatprep.subr.mxu0 0.0
        %1177 = vmatpush1.msra.mxu0 0.0
        %1178 = vmatprep.subr.mxu0 0.0
        %1179 = vmatpush1.msra.mxu0 0.0
        %1180 = vmatprep.subr.mxu0 0.0
        %1181 = vmatpush1.msra.mxu0 0.0
        %1182 = vmatprep.subr.mxu0 0.0
        %1183 = vmatpush1.msra.mxu0 0.0
        %1184 = vmatprep.subr.mxu0 0.0
        %1185 = vmatpush1.msra.mxu0 0.0
        %1186 = vmatprep.subr.mxu0 0.0
        %1187 = vmatpush1.msra.mxu0 0.0
        %1188 = vmatprep.subr.mxu0 0.0
        %1189 = vmatpush1.msra.mxu0 0.0
        %1190 = vmatprep.subr.mxu0 0.0
        %1191 = vmatpush1.msra.mxu0 0.0
        %1192 = vmatprep.subr.mxu0 0.0
        %1193 = vmatpush1.msra.mxu0 0.0
        %1194 = vmatprep.subr.mxu0 0.0
        %1195 = vmatpush1.msra.mxu0 0.0
        %1196 = vmatprep.subr.mxu0 0.0
        %1197 = vmatpush1.msra.mxu0 0.0
        %1198 = vmatprep.subr.mxu0 0.0
        %1199 = vmatpush1.msra.mxu0 0.0
        %1200 = vmatprep.subr.mxu0 0.0
        %1201 = vmatpush1.msra.mxu0 0.0
        %1202 = vmatprep.subr.mxu0 0.0
        %1203 = vmatpush1.msra.mxu0 0.0
        %1204 = vmatprep.subr.mxu0 0.0
        %1205 = vmatpush1.msra.mxu0 0.0
        %1206 = vmatprep.mubr.f32.mxu0 0.0
        %v1207 = vand.u32 %v907, 4294901760
        %v1208 = vsub.f32 %v907, %v1207
        %1209 = vmatmul.mubr.f32.gmra.mrb[0].mxu0 %v1208
        %v1210 = vpop.f32.mrb[0].mxu0
        %v1211 = vadd.f32 %v1115, %v1210
        %v1212 = vpop.f32.mrb[0].mxu0
        %v1213 = vadd.f32 %v1117, %v1212
        %1214 = vmatprep.mubr.f32.mxu0 0.0
        %v1215 = vand.u32 %v910, 4294901760
        %v1216 = vsub.f32 %v910, %v1215
        %1217 = vmatmul.mubr.f32.gmra.mrb[0].mxu0 %v1216
        %v1218 = vpop.f32.mrb[0].mxu0
        %v1219 = vadd.f32 %v1122, %v1218
        %v1220 = vpop.f32.mrb[0].mxu0
        %v1221 = vadd.f32 %v1124, %v1220
        %1222 = vdwg.mxu0
        %v1223 = vand.u32 %v279, 4294901760
        %1224 = vmatprep.subr.mxu0 %v1223
        %v1225 = vand.u32 %v247, 4294901760
        %1226 = vmatpush1.msra.mxu0 %v1225
        %v1227 = vand.u32 %v280, 4294901760
        %1228 = vmatprep.subr.mxu0 %v1227
        %v1229 = vand.u32 %v248, 4294901760
        %1230 = vmatpush1.msra.mxu0 %v1229
        %v1231 = vand.u32 %v281, 4294901760
        %1232 = vmatprep.subr.mxu0 %v1231
        %v1233 = vand.u32 %v249, 4294901760
        %1234 = vmatpush1.msra.mxu0 %v1233
        %v1235 = vand.u32 %v282, 4294901760
        %1236 = vmatprep.subr.mxu0 %v1235
        %v1237 = vand.u32 %v250, 4294901760
        %1238 = vmatpush1.msra.mxu0 %v1237
        %1239 = vmatprep.subr.mxu0 0.0
        %1240 = vmatpush1.msra.mxu0 0.0
        %1241 = vmatprep.subr.mxu0 0.0
        %1242 = vmatpush1.msra.mxu0 0.0
        %1243 = vmatprep.subr.mxu0 0.0
        %1244 = vmatpush1.msra.mxu0 0.0
        %1245 = vmatprep.subr.mxu0 0.0
        %1246 = vmatpush1.msra.mxu0 0.0
        %1247 = vmatprep.subr.mxu0 0.0
        %1248 = vmatpush1.msra.mxu0 0.0
        %1249 = vmatprep.subr.mxu0 0.0
        %1250 = vmatpush1.msra.mxu0 0.0
        %1251 = vmatprep.subr.mxu0 0.0
        %1252 = vmatpush1.msra.mxu0 0.0
        %1253 = vmatprep.subr.mxu0 0.0
        %1254 = vmatpush1.msra.mxu0 0.0
        %1255 = vmatprep.subr.mxu0 0.0
        %1256 = vmatpush1.msra.mxu0 0.0
        %1257 = vmatprep.subr.mxu0 0.0
        %1258 = vmatpush1.msra.mxu0 0.0
        %1259 = vmatprep.subr.mxu0 0.0
        %1260 = vmatpush1.msra.mxu0 0.0
        %1261 = vmatprep.subr.mxu0 0.0
        %1262 = vmatpush1.msra.mxu0 0.0
        %1263 = vmatprep.subr.mxu0 0.0
        %1264 = vmatpush1.msra.mxu0 0.0
        %1265 = vmatprep.subr.mxu0 0.0
        %1266 = vmatpush1.msra.mxu0 0.0
        %1267 = vmatprep.subr.mxu0 0.0
        %1268 = vmatpush1.msra.mxu0 0.0
        %1269 = vmatprep.subr.mxu0 0.0
        %1270 = vmatpush1.msra.mxu0 0.0
        %1271 = vmatprep.subr.mxu0 0.0
        %1272 = vmatpush1.msra.mxu0 0.0
        %1273 = vmatprep.subr.mxu0 0.0
        %1274 = vmatpush1.msra.mxu0 0.0
        %1275 = vmatprep.subr.mxu0 0.0
        %1276 = vmatpush1.msra.mxu0 0.0
        %1277 = vmatprep.subr.mxu0 0.0
        %1278 = vmatpush1.msra.mxu0 0.0
        %1279 = vmatprep.subr.mxu0 0.0
        %1280 = vmatpush1.msra.mxu0 0.0
        %1281 = vmatprep.subr.mxu0 0.0
        %1282 = vmatpush1.msra.mxu0 0.0
        %1283 = vmatprep.subr.mxu0 0.0
        %1284 = vmatpush1.msra.mxu0 0.0
        %1285 = vmatprep.subr.mxu0 0.0
        %1286 = vmatpush1.msra.mxu0 0.0
        %1287 = vmatprep.subr.mxu0 0.0
        %1288 = vmatpush1.msra.mxu0 0.0
        %1289 = vmatprep.subr.mxu0 0.0
        %1290 = vmatpush1.msra.mxu0 0.0
        %1291 = vmatprep.subr.mxu0 0.0
        %1292 = vmatpush1.msra.mxu0 0.0
        %1293 = vmatprep.subr.mxu0 0.0
        %1294 = vmatpush1.msra.mxu0 0.0
        %1295 = vmatprep.mubr.f32.mxu0 0.0
        %v1296 = vand.u32 %v907, 4294901760
        %v1297 = vsub.f32 %v907, %v1296
        %v1298 = vand.u32 %v1297, 4294901760
        %1299 = vmatmul.mubr.f32.gmra.mrb[0].mxu0 %v1298
        %v1300 = vpop.f32.mrb[0].mxu0
        %v1301 = vadd.f32 %v1211, %v1300
        %v1302 = vpop.f32.mrb[0].mxu0
        %v1303 = vadd.f32 %v1213, %v1302
        %1304 = vmatprep.mubr.f32.mxu0 0.0
        %v1305 = vand.u32 %v910, 4294901760
        %v1306 = vsub.f32 %v910, %v1305
        %v1307 = vand.u32 %v1306, 4294901760
        %1308 = vmatmul.mubr.f32.gmra.mrb[0].mxu0 %v1307
        %v1309 = vpop.f32.mrb[0].mxu0
        %v1310 = vadd.f32 %v1219, %v1309
        %v1311 = vpop.f32.mrb[0].mxu0
        %v1312 = vadd.f32 %v1221, %v1311
        %1313 = vdwg.mxu0
        %v1314 = vand.u32 %v279, 4294901760
        %v1315 = vsub.f32 %v279, %v1314
        %v1316 = vand.u32 %v1315, 4294901760
        %1317 = vmatprep.subr.mxu0 %v1316
        %v1318 = vand.u32 %v247, 4294901760
        %v1319 = vsub.f32 %v247, %v1318
        %v1320 = vand.u32 %v1319, 4294901760
        %1321 = vmatpush1.msra.mxu0 %v1320
        %v1322 = vand.u32 %v280, 4294901760
        %v1323 = vsub.f32 %v280, %v1322
        %v1324 = vand.u32 %v1323, 4294901760
        %1325 = vmatprep.subr.mxu0 %v1324
        %v1326 = vand.u32 %v248, 4294901760
        %v1327 = vsub.f32 %v248, %v1326
        %v1328 = vand.u32 %v1327, 4294901760
        %1329 = vmatpush1.msra.mxu0 %v1328
        %v1330 = vand.u32 %v281, 4294901760
        %v1331 = vsub.f32 %v281, %v1330
        %v1332 = vand.u32 %v1331, 4294901760
        %1333 = vmatprep.subr.mxu0 %v1332
        %v1334 = vand.u32 %v249, 4294901760
        %v1335 = vsub.f32 %v249, %v1334
        %v1336 = vand.u32 %v1335, 4294901760
        %1337 = vmatpush1.msra.mxu0 %v1336
        %v1338 = vand.u32 %v282, 4294901760
        %v1339 = vsub.f32 %v282, %v1338
        %v1340 = vand.u32 %v1339, 4294901760
        %1341 = vmatprep.subr.mxu0 %v1340
        %v1342 = vand.u32 %v250, 4294901760
        %v1343 = vsub.f32 %v250, %v1342
        %v1344 = vand.u32 %v1343, 4294901760
        %1345 = vmatpush1.msra.mxu0 %v1344
        %1346 = vmatprep.subr.mxu0 0.0
        %1347 = vmatpush1.msra.mxu0 0.0
        %1348 = vmatprep.subr.mxu0 0.0
        %1349 = vmatpush1.msra.mxu0 0.0
        %1350 = vmatprep.subr.mxu0 0.0
        %1351 = vmatpush1.msra.mxu0 0.0
        %1352 = vmatprep.subr.mxu0 0.0
        %1353 = vmatpush1.msra.mxu0 0.0
        %1354 = vmatprep.subr.mxu0 0.0
        %1355 = vmatpush1.msra.mxu0 0.0
        %1356 = vmatprep.subr.mxu0 0.0
        %1357 = vmatpush1.msra.mxu0 0.0
        %1358 = vmatprep.subr.mxu0 0.0
        %1359 = vmatpush1.msra.mxu0 0.0
        %1360 = vmatprep.subr.mxu0 0.0
        %1361 = vmatpush1.msra.mxu0 0.0
        %1362 = vmatprep.subr.mxu0 0.0
        %1363 = vmatpush1.msra.mxu0 0.0
        %1364 = vmatprep.subr.mxu0 0.0
        %1365 = vmatpush1.msra.mxu0 0.0
        %1366 = vmatprep.subr.mxu0 0.0
        %1367 = vmatpush1.msra.mxu0 0.0
        %1368 = vmatprep.subr.mxu0 0.0
        %1369 = vmatpush1.msra.mxu0 0.0
        %1370 = vmatprep.subr.mxu0 0.0
        %1371 = vmatpush1.msra.mxu0 0.0
        %1372 = vmatprep.subr.mxu0 0.0
        %1373 = vmatpush1.msra.mxu0 0.0
        %1374 = vmatprep.subr.mxu0 0.0
        %1375 = vmatpush1.msra.mxu0 0.0
        %1376 = vmatprep.subr.mxu0 0.0
        %1377 = vmatpush1.msra.mxu0 0.0
        %1378 = vmatprep.subr.mxu0 0.0
        %1379 = vmatpush1.msra.mxu0 0.0
        %1380 = vmatprep.subr.mxu0 0.0
        %1381 = vmatpush1.msra.mxu0 0.0
        %1382 = vmatprep.subr.mxu0 0.0
        %1383 = vmatpush1.msra.mxu0 0.0
        %1384 = vmatprep.subr.mxu0 0.0
        %1385 = vmatpush1.msra.mxu0 0.0
        %1386 = vmatprep.subr.mxu0 0.0
        %1387 = vmatpush1.msra.mxu0 0.0
        %1388 = vmatprep.subr.mxu0 0.0
        %1389 = vmatpush1.msra.mxu0 0.0
        %1390 = vmatprep.subr.mxu0 0.0
        %1391 = vmatpush1.msra.mxu0 0.0
        %1392 = vmatprep.subr.mxu0 0.0
        %1393 = vmatpush1.msra.mxu0 0.0
        %1394 = vmatprep.subr.mxu0 0.0
        %1395 = vmatpush1.msra.mxu0 0.0
        %1396 = vmatprep.subr.mxu0 0.0
        %1397 = vmatpush1.msra.mxu0 0.0
        %1398 = vmatprep.subr.mxu0 0.0
        %1399 = vmatpush1.msra.mxu0 0.0
        %1400 = vmatprep.subr.mxu0 0.0
        %1401 = vmatpush1.msra.mxu0 0.0
        %1402 = vmatprep.mubr.f32.mxu0 0.0
        %v1403 = vand.u32 %v907, 4294901760
        %1404 = vmatmul.mubr.f32.gmra.mrb[0].mxu0 %v1403
        %v1405 = vpop.f32.mrb[0].mxu0
        %v1406 = vadd.f32 %v1301, %v1405
        %v1407 = vpop.f32.mrb[0].mxu0
        %v1408 = vadd.f32 %v1303, %v1407
        %1409 = vmatprep.mubr.f32.mxu0 0.0
        %v1410 = vand.u32 %v910, 4294901760
        %1411 = vmatmul.mubr.f32.gmra.mrb[0].mxu0 %v1410
        %v1412 = vpop.f32.mrb[0].mxu0
        %v1413 = vadd.f32 %v1310, %v1412
        %v1414 = vpop.f32.mrb[0].mxu0
        %v1415 = vadd.f32 %v1312, %v1414
        %1416 = vdwg.mxu0
        %v1417 = vand.u32 %v279, 4294901760
        %1418 = vmatprep.subr.mxu0 %v1417
        %v1419 = vand.u32 %v247, 4294901760
        %1420 = vmatpush1.msra.mxu0 %v1419
        %v1421 = vand.u32 %v280, 4294901760
        %1422 = vmatprep.subr.mxu0 %v1421
        %v1423 = vand.u32 %v248, 4294901760
        %1424 = vmatpush1.msra.mxu0 %v1423
        %v1425 = vand.u32 %v281, 4294901760
        %1426 = vmatprep.subr.mxu0 %v1425
        %v1427 = vand.u32 %v249, 4294901760
        %1428 = vmatpush1.msra.mxu0 %v1427
        %v1429 = vand.u32 %v282, 4294901760
        %1430 = vmatprep.subr.mxu0 %v1429
        %v1431 = vand.u32 %v250, 4294901760
        %1432 = vmatpush1.msra.mxu0 %v1431
        %1433 = vmatprep.subr.mxu0 0.0
        %1434 = vmatpush1.msra.mxu0 0.0
        %1435 = vmatprep.subr.mxu0 0.0
        %1436 = vmatpush1.msra.mxu0 0.0
        %1437 = vmatprep.subr.mxu0 0.0
        %1438 = vmatpush1.msra.mxu0 0.0
        %1439 = vmatprep.subr.mxu0 0.0
        %1440 = vmatpush1.msra.mxu0 0.0
        %1441 = vmatprep.subr.mxu0 0.0
        %1442 = vmatpush1.msra.mxu0 0.0
        %1443 = vmatprep.subr.mxu0 0.0
        %1444 = vmatpush1.msra.mxu0 0.0
        %1445 = vmatprep.subr.mxu0 0.0
        %1446 = vmatpush1.msra.mxu0 0.0
        %1447 = vmatprep.subr.mxu0 0.0
        %1448 = vmatpush1.msra.mxu0 0.0
        %1449 = vmatprep.subr.mxu0 0.0
        %1450 = vmatpush1.msra.mxu0 0.0
        %1451 = vmatprep.subr.mxu0 0.0
        %1452 = vmatpush1.msra.mxu0 0.0
        %1453 = vmatprep.subr.mxu0 0.0
        %1454 = vmatpush1.msra.mxu0 0.0
        %1455 = vmatprep.subr.mxu0 0.0
        %1456 = vmatpush1.msra.mxu0 0.0
        %1457 = vmatprep.subr.mxu0 0.0
        %1458 = vmatpush1.msra.mxu0 0.0
        %1459 = vmatprep.subr.mxu0 0.0
        %1460 = vmatpush1.msra.mxu0 0.0
        %1461 = vmatprep.subr.mxu0 0.0
        %1462 = vmatpush1.msra.mxu0 0.0
        %1463 = vmatprep.subr.mxu0 0.0
        %1464 = vmatpush1.msra.mxu0 0.0
        %1465 = vmatprep.subr.mxu0 0.0
        %1466 = vmatpush1.msra.mxu0 0.0
        %1467 = vmatprep.subr.mxu0 0.0
        %1468 = vmatpush1.msra.mxu0 0.0
        %1469 = vmatprep.subr.mxu0 0.0
        %1470 = vmatpush1.msra.mxu0 0.0
        %1471 = vmatprep.subr.mxu0 0.0
        %1472 = vmatpush1.msra.mxu0 0.0
        %1473 = vmatprep.subr.mxu0 0.0
        %1474 = vmatpush1.msra.mxu0 0.0
        %1475 = vmatprep.subr.mxu0 0.0
        %1476 = vmatpush1.msra.mxu0 0.0
        %1477 = vmatprep.subr.mxu0 0.0
        %1478 = vmatpush1.msra.mxu0 0.0
        %1479 = vmatprep.subr.mxu0 0.0
        %1480 = vmatpush1.msra.mxu0 0.0
        %1481 = vmatprep.subr.mxu0 0.0
        %1482 = vmatpush1.msra.mxu0 0.0
        %1483 = vmatprep.subr.mxu0 0.0
        %1484 = vmatpush1.msra.mxu0 0.0
        %1485 = vmatprep.subr.mxu0 0.0
        %1486 = vmatpush1.msra.mxu0 0.0
        %1487 = vmatprep.subr.mxu0 0.0
        %1488 = vmatpush1.msra.mxu0 0.0
        %1489 = vmatprep.mubr.f32.mxu0 0.0
        %v1490 = vand.u32 %v907, 4294901760
        %1491 = vmatmul.mubr.f32.gmra.mrb[0].mxu0 %v1490
        %v1492 = vpop.f32.mrb[0].mxu0
        %v1493 = vadd.f32 %v1406, %v1492
        %v1494 = vpop.f32.mrb[0].mxu0
        %v1495 = vadd.f32 %v1408, %v1494
        %1496 = vmatprep.mubr.f32.mxu0 0.0
        %v1497 = vand.u32 %v910, 4294901760
        %1498 = vmatmul.mubr.f32.gmra.mrb[0].mxu0 %v1497
        %v1499 = vpop.f32.mrb[0].mxu0
        %v1500 = vadd.f32 %v1413, %v1499
        %v1501 = vpop.f32.mrb[0].mxu0
        %v1502 = vadd.f32 %v1415, %v1501
        %1503 = vdwg.mxu0
        %v1504 = vld [vmem:[%s3] sm:$0xff]
        %v1505 = vld [vmem:[%s3 + $0x8] sm:$0xff]
        %1507 = vset.pattern.permute.xlu0 0
        %1508 = vperm.xlu0 %1507, %v1504
        %v1509 = vpop.permute.xlu0 %1508
        %1512 = vset.pattern.permute.xlu0 0
        %1513 = vperm.xlu0 %1512, %v1505
        %v1514 = vpop.permute.xlu0 %1513
        %v1516 = vadd.f32 %v1493, %v1509
        %v1517 = vadd.f32 %v1495, %v1509
        %v1518 = vadd.f32 %v1500, %v1514
        %v1519 = vadd.f32 %v1502, %v1514
        %v1520 = vmax.f32 %v1516, %v1518
        %v1521 = vrot.slane %v1520, 4
        %v1522 = vmax.f32 %v1520, %v1521
        %v1523 = vrot.slane %v1522, 2
        %v1524 = vmax.f32 %v1522, %v1523
        %v1525 = vrot.slane %v1524, 1
        %v1526 = vmax.f32 %v1524, %v1525
        %v1527 = vmax.f32 %v1517, %v1519
        %v1528 = vrot.slane %v1527, 4
        %v1529 = vmax.f32 %v1527, %v1528
        %v1530 = vrot.slane %v1529, 2
        %v1531 = vmax.f32 %v1529, %v1530
        %v1532 = vrot.slane %v1531, 1
        %v1533 = vmax.f32 %v1531, %v1532
        %v1534 = vsub.f32 %v1516, %v1526
        %v1535 = vsub.f32 %v1517, %v1533
        %v1536 = vsub.f32 %v1518, %v1526
        %v1537 = vsub.f32 %v1519, %v1533
        %v1538 = vmul.f32 %v1534, 1.442695
        %v1539 = vpow.pop %v1538
        %v1540 = vmul.f32 %v1535, 1.442695
        %v1541 = vpow.pop %v1540
        %v1542 = vmul.f32 %v1536, 1.442695
        %v1543 = vpow.pop %v1542
        %v1544 = vmul.f32 %v1537, 1.442695
        %v1545 = vpow.pop %v1544
        %v1546 = vadd.f32 %v1539, %v1543
        %v1547 = vrot.slane %v1546, 4
        %v1548 = vadd.f32 %v1546, %v1547
        %v1549 = vrot.slane %v1548, 2
        %v1550 = vadd.f32 %v1548, %v1549
        %v1551 = vrot.slane %v1550, 1
        %v1552 = vadd.f32 %v1550, %v1551
        %v1553 = vadd.f32 %v1541, %v1545
        %v1554 = vrot.slane %v1553, 4
        %v1555 = vadd.f32 %v1553, %v1554
        %v1556 = vrot.slane %v1555, 2
        %v1557 = vadd.f32 %v1555, %v1556
        %v1558 = vrot.slane %v1557, 1
        %v1559 = vadd.f32 %v1557, %v1558
        %v1560 = vlog2.pop %v1552
        %v1561 = vmul.f32 %v1560, 0.6931472
        %v1562 = vlog2.pop %v1559
        %v1563 = vmul.f32 %v1562, 0.6931472
        %v1564 = vadd.f32 %v1526, %v1561
        %v1565 = vadd.f32 %v1533, %v1563
        %v1568 = vcombine.low %v1564, %v1565
        %v1570 = vunpack.c.l.s4 1966171168
        %v1571 = vunpack.c.0.s8 %v1570
        %v1572 = vlaneseq
        %v1573 = vshrl.u32 %v1572, 7
        %v1574 = vsub.s32 %v1571, %v1573
        %v1575 = vrot.slane %v1568, %v1574
        %v1577 = vunpack.c.l.s4 1966171168
        %v1578 = vunpack.c.0.s8 %v1577
        %v1579 = vlaneseq
        %v1580 = vshrl.u32 %v1579, 7
        %v1581 = vsub.s32 %v1578, %v1580
        %v1582 = vrot.slane %v1575, %v1581
        %v1584 = vlaneseq
        %vm1585 = vcmp.ge.s32.totalorder %v1584, 0
        %vm1586 = vcmp.lt.s32.totalorder %v1584, 256
        %vm1587 = vmand %vm1585, %vm1586
        %1588 = vst.msk [vmem:[%s191] sm:$0x3] %vm1587, %v1582
        %s1589 = sand.u32 %s115, 1
        %s1590 = scalar_lea.sflag [#allocation3], %s1589
        %s1591 = sand.u32 %s115, 1
        %s1592 = smul.addr %s1591, 2
        %s1593 = scalar_lea.vmem [#allocation2], %s1592
        // Predicated region
        $region37: #{tpu_custom_call.1} parent=35 // pred_check
          %p1594 = pneg %p125
        $region38: #{tpu_custom_call.1} parent=35 // pred_check_branch
          %1596 = sbr.rel (%p1594) target = $region40
        $region39: #{tpu_custom_call.1} parent=35 // pred_region
          %s1597 = smul.u32 2, %s18
          %s1599 = ssub.s32 32, 32
          %1600 = vsyncadd %s1590, %s1599
          %s1601 = smul.addr %s1597, 16
          %s1602 = scalar_lea.hbm %s4, %s1601
          %s1604 = sshll.u32 %s1593, 4
          %s1605 = int_to_ptr.vmem [resolvable:$true] %s1604
          %1607 = dma.vmem_to_hbm [thread:$0]  %s1605, 32, %s1602, %s1590
        $region40: #{tpu_custom_call.1} parent=35 // pred_fallthru
          _
      $region36: #{tpu_custom_call.1} parent=5 // pred_fallthru
        _
      %p1608 = scmp.le.s32.totalorder 2, %s13
      // Predicated region
      $region41: #{tpu_custom_call.1} parent=5 // pred_check
        %p1609 = pneg %p1608
      $region42: #{tpu_custom_call.1} parent=5 // pred_check_branch
        %1611 = sbr.rel (%p1609) target = $region44
      $region43: #{tpu_custom_call.1} parent=5 // pred_region
        %s1612 = ssub.s32 %s13, 2
        // Predicated region
        $region45: #{tpu_custom_call.1} parent=43 // pred_check
          %p1613 = pneg %p131
        $region46: #{tpu_custom_call.1} parent=43 // pred_check_branch
          %1615 = sbr.rel (%p1613) target = $region48
        $region47: #{tpu_custom_call.1} parent=43 // pred_region
          %s1616 = sand.u32 %s116, 1
          %s1617 = scalar_lea.sflag [#allocation3], %s1616
          %s1618 = sand.u32 %s116, 1
          %s1619 = smul.addr %s1618, 2
          %s1620 = scalar_lea.vmem [#allocation2], %s1619
          %1621 = dma.done %s1617, 32
        $region48: #{tpu_custom_call.1} parent=43 // pred_fallthru
          _
      $region44: #{tpu_custom_call.1} parent=5 // pred_fallthru
        _
    $region6: #{tpu_custom_call.1} parent=1 // loop_footer
      %s17 = sadd.s32 1, %s13
    $region7: #{tpu_custom_call.1} parent=1 // loop_footer_branch
      %12 = sbr.rel target = $region3
    $region8: #{tpu_custom_call.1} parent=1 // loop_exit
      _
    %1622 = vsyncpa [#allocation3], 1
    %s1623 = scalar_lea.sflag [#allocation3], 1
    %1624 = vsyncpa %s1623, 1

</llo_original>
